<compile_context>
chip_gen: v7x
topology: tpu7x:2x2x1
jax: 0.10.0
libtpu: 0.0.40
codegen_flags: <defaults>
</compile_context>

<pallas_src>
import jax
import jax.numpy as jnp
from jax.experimental import pallas as pl
from jax.experimental.pallas import tpu as pltpu

BN_EPS = 1e-5

# Packed parameter layout
#   w_a  : (704, 256) bf16 = [fc1 (640,256) ; fc4 (64,256)]            (rows)
#   w_b  : (256,1280) bf16 = [fc2 | fc3_mean,fc3_var (128) | fc5 | fc6] (cols)
#   bias : (14, 640)  f32  rows = fc1_b, fc2_b, [fc3m_b|fc3v_b], fc4_b, fc5_b,
#                                 fc6_b, bn1_g, bn1_b, bn2_g, bn2_b,
#                                 bn3_g, bn3_b, bn4_g, bn4_b   (zero padded)


def _bn_train(h, gamma, beta):
    # BatchNorm1d, training mode: batch mean / biased batch var (single pass).
    mu = jnp.mean(h, axis=0, keepdims=True)
    var = jnp.mean(h * h, axis=0, keepdims=True) - mu * mu
    return (h - mu) * jax.lax.rsqrt(var + BN_EPS) * gamma + beta


def vae_kernel(x_ref, eps_ref, wa_ref, wb_ref, bias_ref, loss_ref, z_ref, y_ref):
    x = x_ref[...]                         # (B, 640) f32
    eps = eps_ref[...]                     # (B, 64)  f32

    # -------- unpack weights (bf16 storage, upcast once, f32 accumulation) ---
    w1 = wa_ref[0:640, :].astype(jnp.float32)      # (640, 256)
    w4 = wa_ref[640:704, :].astype(jnp.float32)    # (64, 256)
    w2 = wb_ref[:, 0:256].astype(jnp.float32)      # (256, 256)
    w3 = wb_ref[:, 256:384].astype(jnp.float32)    # (256, 128) fused mean|logvar
    w5 = wb_ref[:, 384:640].astype(jnp.float32)    # (256, 256)
    w6 = wb_ref[:, 640:1280].astype(jnp.float32)   # (256, 640)

    b1 = bias_ref[0:1, 0:256]
    b2 = bias_ref[1:2, 0:256]
    b_mv = bias_ref[2:3, 0:128]
    b4 = bias_ref[3:4, 0:256]
    b5 = bias_ref[4:5, 0:256]
    b6 = bias_ref[5:6, 0:640]
    g1, be1 = bias_ref[6:7, 0:256], bias_ref[7:8, 0:256]
    g2, be2 = bias_ref[8:9, 0:256], bias_ref[9:10, 0:256]
    g3, be3 = bias_ref[10:11, 0:256], bias_ref[11:12, 0:256]
    g4, be4 = bias_ref[12:13, 0:256], bias_ref[13:14, 0:256]

    # ---------------- encoder ----------------
    h = jnp.maximum(jnp.dot(x, w1, preferred_element_type=jnp.float32) + b1, 0.0)
    h = _bn_train(h, g1, be1)
    h = jnp.maximum(jnp.dot(h, w2, preferred_element_type=jnp.float32) + b2, 0.0)
    h = _bn_train(h, g2, be2)

    # fused mean / log_var projection: one lane-dense 128-wide matmul
    mv = jnp.dot(h, w3, preferred_element_type=jnp.float32) + b_mv   # (B, 128)
    mean = mv[:, 0:64]
    log_var = mv[:, 64:128]

    # ---------------- KL + reparameterization ----------------
    e = jnp.exp(0.5 * log_var)                       # exp(log_var) = e * e
    kl = 0.5 * jnp.sum(1.0 + log_var - mean * mean - e * e)
    z = mean + eps * e
    z_ref[...] = z

    # ---------------- decoder ----------------
    d = jnp.maximum(jnp.dot(z, w4, preferred_element_type=jnp.float32) + b4, 0.0)
    d = _bn_train(d, g3, be3)
    d = jnp.maximum(jnp.dot(d, w5, preferred_element_type=jnp.float32) + b5, 0.0)
    d = _bn_train(d, g4, be4)
    y = jax.nn.sigmoid(jnp.dot(d, w6, preferred_element_type=jnp.float32) + b6)
    y_ref[...] = y

    # ---------------- reconstruction (MSE, mean reduction) ----------------
    diff = y - x
    rec = jnp.sum(diff * diff) * (1.0 / float(diff.size))

    # lower_bound = [KL, rec]; return -(KL + rec)
    loss_ref[0, 0] = -(kl + rec)


def init_params(key):
    """Deterministic synthetic parameters, packed for the kernel."""
    dims = {
        "fc1": (640, 256), "fc2": (256, 256),
        "fc3_mean": (256, 64), "fc3_var": (256, 64),
        "fc4": (64, 256), "fc5": (256, 256), "fc6": (256, 640),
    }
    raw = {}
    keys = jax.random.split(key, len(dims))
    for k, (name, (fin, fout)) in zip(keys, dims.items()):
        kw, kb = jax.random.split(k)
        scale = 1.0 / jnp.sqrt(jnp.float32(fin))
        raw[name + "_w"] = jax.random.uniform(kw, (fin, fout), jnp.float32,
                                              -scale, scale)
        raw[name + "_b"] = jax.random.uniform(kb, (1, fout), jnp.float32,
                                              -scale, scale)

    # packed weights (bf16 storage)
    w_a = jnp.concatenate([raw["fc1_w"], raw["fc4_w"]], axis=0).astype(jnp.bfloat16)
    w3_fused = jnp.concatenate([raw["fc3_mean_w"], raw["fc3_var_w"]], axis=1)
    w_b = jnp.concatenate(
        [raw["fc2_w"], w3_fused, raw["fc5_w"], raw["fc6_w"]],
        axis=1).astype(jnp.bfloat16)

    # packed biases + BN affine params (gamma=1, beta=0 like fresh BatchNorm1d)
    def row(v):
        return jnp.pad(v, ((0, 0), (0, 640 - v.shape[1])))

    ones = jnp.ones((1, 256), jnp.float32)
    zeros = jnp.zeros((1, 256), jnp.float32)
    bias = jnp.concatenate([
        row(raw["fc1_b"]),
        row(raw["fc2_b"]),
        row(jnp.concatenate([raw["fc3_mean_b"], raw["fc3_var_b"]], axis=1)),
        row(raw["fc4_b"]),
        row(raw["fc5_b"]),
        raw["fc6_b"],
        row(ones), row(zeros),   # bn1 gamma, beta
        row(ones), row(zeros),   # bn2
        row(ones), row(zeros),   # bn3
        row(ones), row(zeros),   # bn4
    ], axis=0)                    # (14, 640) f32

    return {"w_a": w_a, "w_b": w_b, "bias": bias}


def vae_forward(x, eps, params):
    B = x.shape[0]
    vmem = pl.BlockSpec(memory_space=pltpu.MemorySpace.VMEM)
    smem = pl.BlockSpec(memory_space=pltpu.MemorySpace.SMEM)

    flops = 2 * B * (640 * 256 + 256 * 256 + 256 * 128
                     + 64 * 256 + 256 * 256 + 256 * 640)
    transcendentals = B * (64 + 640) + 4 * 256
    bytes_accessed = ((params["w_a"].size + params["w_b"].size) * 2
                      + params["bias"].size * 4
                      + (x.size + eps.size) * 4
                      + (B * 64 + B * 640) * 4 + 4)

    loss, z, y = pl.pallas_call(
        vae_kernel,
        out_shape=(
            jax.ShapeDtypeStruct((1, 1), jnp.float32),     # -(KL + MSE), SMEM
            jax.ShapeDtypeStruct((B, 64), jnp.float32),    # z
            jax.ShapeDtypeStruct((B, 640), jnp.float32),   # y
        ),
        in_specs=[vmem] * 5,
        out_specs=(smem, vmem, vmem),
        compiler_params=pltpu.CompilerParams(vmem_limit_bytes=16 << 20),
        cost_estimate=pl.CostEstimate(flops=flops,
                                      transcendentals=transcendentals,
                                      bytes_accessed=bytes_accessed),
    )(x, eps, params["w_a"], params["w_b"], params["bias"])
    return loss[0, 0], z, y


def vae_forward_ref(x, eps, params):
    """Pure-JAX reference; unpacks the same (bf16-quantized) packed params."""
    wa = params["w_a"].astype(jnp.float32)
    wb = params["w_b"].astype(jnp.float32)
    bias = params["bias"]

    w1, w4 = wa[0:640], wa[640:704]
    w2, w3, w5, w6 = wb[:, 0:256], wb[:, 256:384], wb[:, 384:640], wb[:, 640:1280]
    b1, b2, b_mv = bias[0:1, 0:256], bias[1:2, 0:256], bias[2:3, 0:128]
    b4, b5, b6 = bias[3:4, 0:256], bias[4:5, 0:256], bias[5:6, 0:640]
    g1, be1 = bias[6:7, 0:256], bias[7:8, 0:256]
    g2, be2 = bias[8:9, 0:256], bias[9:10, 0:256]
    g3, be3 = bias[10:11, 0:256], bias[11:12, 0:256]
    g4, be4 = bias[12:13, 0:256], bias[13:14, 0:256]

    h = jnp.maximum(x @ w1 + b1, 0.0)
    h = _bn_train(h, g1, be1)
    h = jnp.maximum(h @ w2 + b2, 0.0)
    h = _bn_train(h, g2, be2)
    mv = h @ w3 + b_mv
    mean, log_var = mv[:, 0:64], mv[:, 64:128]
    e = jnp.exp(0.5 * log_var)
    kl = 0.5 * jnp.sum(1.0 + log_var - mean * mean - e * e)
    z = mean + eps * e
    d = jnp.maximum(z @ w4 + b4, 0.0)
    d = _bn_train(d, g3, be3)
    d = jnp.maximum(d @ w5 + b5, 0.0)
    d = _bn_train(d, g4, be4)
    y = jax.nn.sigmoid(d @ w6 + b6)
    rec = jnp.mean((y - x) ** 2)
    return -(kl + rec), z, y


if __name__ == "__main__":
    key = jax.random.PRNGKey(0)
    k_param, k_x, k_eps = jax.random.split(key, 3)

    B = 8
    params = init_params(k_param)
    x = jax.random.uniform(k_x, (B, 640), jnp.float32)       # input in [0,1)
    eps = jax.random.normal(k_eps, (B, 64), jnp.float32)     # reparam noise

    loss, z, y = jax.jit(vae_forward)(x, eps, params)
    jax.block_until_ready((loss, z, y))

    loss_ref, z_ref, y_ref = vae_forward_ref(x, eps, params)
    assert jnp.allclose(loss, loss_ref, rtol=1e-3, atol=1e-3), (loss, loss_ref)
    assert jnp.allclose(z, z_ref, rtol=1e-3, atol=1e-3)
    assert jnp.allclose(y, y_ref, rtol=1e-3, atol=1e-3)

    print("KERNEL_OK")
</pallas_src>

<mosaic_0001>
module attributes {stable_mosaic.version = 11 : i64} {
  func.func @vae_kernel(%arg0: memref<8x640xf32, #tpu.memory_space<vmem>>, %arg1: memref<8x64xf32, #tpu.memory_space<vmem>>, %arg2: memref<704x256xbf16, #tpu.memory_space<vmem>>, %arg3: memref<256x1280xbf16, #tpu.memory_space<vmem>>, %arg4: memref<14x640xf32, #tpu.memory_space<vmem>>, %arg5: memref<1x1xf32, #tpu.memory_space<smem>>, %arg6: memref<8x64xf32, #tpu.memory_space<vmem>>, %arg7: memref<8x640xf32, #tpu.memory_space<vmem>>) attributes {dimension_semantics = [], scalar_prefetch = 0 : i64, scratch_operands = 0 : i64, tpu.core_type = #tpu.core_type<tc>} {
    %c0 = arith.constant 0 : index
    %c0_0 = arith.constant 0 : index
    %0 = vector.load %arg0[%c0, %c0_0] : memref<8x640xf32, #tpu.memory_space<vmem>>, vector<8x640xf32>
    %c0_1 = arith.constant 0 : index
    %c0_2 = arith.constant 0 : index
    %1 = vector.load %arg1[%c0_1, %c0_2] : memref<8x64xf32, #tpu.memory_space<vmem>>, vector<8x64xf32>
    %c0_3 = arith.constant 0 : index
    %c0_4 = arith.constant 0 : index
    %2 = vector.load %arg2[%c0_3, %c0_4] : memref<704x256xbf16, #tpu.memory_space<vmem>>, vector<640x256xbf16>
    %3 = arith.extf %2 : vector<640x256xbf16> to vector<640x256xf32>
    %c640 = arith.constant 640 : index
    %c0_5 = arith.constant 0 : index
    %4 = vector.load %arg2[%c640, %c0_5] : memref<704x256xbf16, #tpu.memory_space<vmem>>, vector<64x256xbf16>
    %5 = arith.extf %4 : vector<64x256xbf16> to vector<64x256xf32>
    %c0_6 = arith.constant 0 : index
    %c0_7 = arith.constant 0 : index
    %6 = vector.load %arg3[%c0_6, %c0_7] : memref<256x1280xbf16, #tpu.memory_space<vmem>>, vector<256x256xbf16>
    %7 = arith.extf %6 : vector<256x256xbf16> to vector<256x256xf32>
    %c0_8 = arith.constant 0 : index
    %c256 = arith.constant 256 : index
    %8 = vector.load %arg3[%c0_8, %c256] : memref<256x1280xbf16, #tpu.memory_space<vmem>>, vector<256x128xbf16>
    %9 = arith.extf %8 : vector<256x128xbf16> to vector<256x128xf32>
    %c0_9 = arith.constant 0 : index
    %c384 = arith.constant 384 : index
    %10 = vector.load %arg3[%c0_9, %c384] : memref<256x1280xbf16, #tpu.memory_space<vmem>>, vector<256x256xbf16>
    %11 = arith.extf %10 : vector<256x256xbf16> to vector<256x256xf32>
    %c0_10 = arith.constant 0 : index
    %c640_11 = arith.constant 640 : index
    %12 = vector.load %arg3[%c0_10, %c640_11] : memref<256x1280xbf16, #tpu.memory_space<vmem>>, vector<256x640xbf16>
    %13 = arith.extf %12 : vector<256x640xbf16> to vector<256x640xf32>
    %c0_12 = arith.constant 0 : index
    %c0_13 = arith.constant 0 : index
    %14 = vector.load %arg4[%c0_12, %c0_13] : memref<14x640xf32, #tpu.memory_space<vmem>>, vector<1x256xf32>
    %c1 = arith.constant 1 : index
    %c0_14 = arith.constant 0 : index
    %15 = vector.load %arg4[%c1, %c0_14] : memref<14x640xf32, #tpu.memory_space<vmem>>, vector<1x256xf32>
    %c2 = arith.constant 2 : index
    %c0_15 = arith.constant 0 : index
    %16 = vector.load %arg4[%c2, %c0_15] : memref<14x640xf32, #tpu.memory_space<vmem>>, vector<1x128xf32>
    %c3 = arith.constant 3 : index
    %c0_16 = arith.constant 0 : index
    %17 = vector.load %arg4[%c3, %c0_16] : memref<14x640xf32, #tpu.memory_space<vmem>>, vector<1x256xf32>
    %c4 = arith.constant 4 : index
    %c0_17 = arith.constant 0 : index
    %18 = vector.load %arg4[%c4, %c0_17] : memref<14x640xf32, #tpu.memory_space<vmem>>, vector<1x256xf32>
    %c5 = arith.constant 5 : index
    %c0_18 = arith.constant 0 : index
    %19 = vector.load %arg4[%c5, %c0_18] : memref<14x640xf32, #tpu.memory_space<vmem>>, vector<1x640xf32>
    %c6 = arith.constant 6 : index
    %c0_19 = arith.constant 0 : index
    %20 = vector.load %arg4[%c6, %c0_19] : memref<14x640xf32, #tpu.memory_space<vmem>>, vector<1x256xf32>
    %c7 = arith.constant 7 : index
    %c0_20 = arith.constant 0 : index
    %21 = vector.load %arg4[%c7, %c0_20] : memref<14x640xf32, #tpu.memory_space<vmem>>, vector<1x256xf32>
    %c8 = arith.constant 8 : index
    %c0_21 = arith.constant 0 : index
    %22 = vector.load %arg4[%c8, %c0_21] : memref<14x640xf32, #tpu.memory_space<vmem>>, vector<1x256xf32>
    %c9 = arith.constant 9 : index
    %c0_22 = arith.constant 0 : index
    %23 = vector.load %arg4[%c9, %c0_22] : memref<14x640xf32, #tpu.memory_space<vmem>>, vector<1x256xf32>
    %c10 = arith.constant 10 : index
    %c0_23 = arith.constant 0 : index
    %24 = vector.load %arg4[%c10, %c0_23] : memref<14x640xf32, #tpu.memory_space<vmem>>, vector<1x256xf32>
    %c11 = arith.constant 11 : index
    %c0_24 = arith.constant 0 : index
    %25 = vector.load %arg4[%c11, %c0_24] : memref<14x640xf32, #tpu.memory_space<vmem>>, vector<1x256xf32>
    %c12 = arith.constant 12 : index
    %c0_25 = arith.constant 0 : index
    %26 = vector.load %arg4[%c12, %c0_25] : memref<14x640xf32, #tpu.memory_space<vmem>>, vector<1x256xf32>
    %c13 = arith.constant 13 : index
    %c0_26 = arith.constant 0 : index
    %27 = vector.load %arg4[%c13, %c0_26] : memref<14x640xf32, #tpu.memory_space<vmem>>, vector<1x256xf32>
    %cst = arith.constant dense<0.000000e+00> : vector<8x256xf32>
    %28 = tpu.matmul %0, %3, %cst {dimension_numbers = #tpu.dot_dimension_numbers<[1], [0], [0], [1], [0, 0, 1, 1], [], []>} : vector<8x640xf32>, vector<640x256xf32>, vector<8x256xf32> -> vector<8x256xf32>
    %29 = vector.broadcast %14 : vector<1x256xf32> to vector<8x256xf32>
    %30 = arith.addf %28, %29 : vector<8x256xf32>
    %cst_27 = arith.constant 0.000000e+00 : f32
    %31 = vector.broadcast %cst_27 : f32 to vector<8x256xf32>
    %32 = arith.maximumf %30, %31 : vector<8x256xf32>
    %cst_28 = arith.constant dense<0.000000e+00> : vector<256xf32>
    %33 = vector.multi_reduction <add>, %32, %cst_28 [0] : vector<8x256xf32> to vector<256xf32>
    %34 = vector.shape_cast %33 : vector<256xf32> to vector<1x256xf32>
    %cst_29 = arith.constant 8.000000e+00 : f32
    %35 = vector.broadcast %cst_29 : f32 to vector<1x256xf32>
    %36 = arith.divf %34, %35 : vector<1x256xf32>
    %37 = arith.mulf %32, %32 : vector<8x256xf32>
    %cst_30 = arith.constant dense<0.000000e+00> : vector<256xf32>
    %38 = vector.multi_reduction <add>, %37, %cst_30 [0] : vector<8x256xf32> to vector<256xf32>
    %39 = vector.shape_cast %38 : vector<256xf32> to vector<1x256xf32>
    %cst_31 = arith.constant 8.000000e+00 : f32
    %40 = vector.broadcast %cst_31 : f32 to vector<1x256xf32>
    %41 = arith.divf %39, %40 : vector<1x256xf32>
    %42 = arith.mulf %36, %36 : vector<1x256xf32>
    %43 = arith.subf %41, %42 : vector<1x256xf32>
    %44 = vector.broadcast %36 : vector<1x256xf32> to vector<8x256xf32>
    %45 = arith.subf %32, %44 : vector<8x256xf32>
    %cst_32 = arith.constant 9.99999974E-6 : f32
    %46 = vector.broadcast %cst_32 : f32 to vector<1x256xf32>
    %47 = arith.addf %43, %46 : vector<1x256xf32>
    %48 = math.rsqrt %47 : vector<1x256xf32>
    %49 = vector.broadcast %48 : vector<1x256xf32> to vector<8x256xf32>
    %50 = arith.mulf %45, %49 : vector<8x256xf32>
    %51 = vector.broadcast %20 : vector<1x256xf32> to vector<8x256xf32>
    %52 = arith.mulf %50, %51 : vector<8x256xf32>
    %53 = vector.broadcast %21 : vector<1x256xf32> to vector<8x256xf32>
    %54 = arith.addf %52, %53 : vector<8x256xf32>
    %cst_33 = arith.constant dense<0.000000e+00> : vector<8x256xf32>
    %55 = tpu.matmul %54, %7, %cst_33 {dimension_numbers = #tpu.dot_dimension_numbers<[1], [0], [0], [1], [0, 0, 1, 1], [], []>} : vector<8x256xf32>, vector<256x256xf32>, vector<8x256xf32> -> vector<8x256xf32>
    %56 = vector.broadcast %15 : vector<1x256xf32> to vector<8x256xf32>
    %57 = arith.addf %55, %56 : vector<8x256xf32>
    %cst_34 = arith.constant 0.000000e+00 : f32
    %58 = vector.broadcast %cst_34 : f32 to vector<8x256xf32>
    %59 = arith.maximumf %57, %58 : vector<8x256xf32>
    %cst_35 = arith.constant dense<0.000000e+00> : vector<256xf32>
    %60 = vector.multi_reduction <add>, %59, %cst_35 [0] : vector<8x256xf32> to vector<256xf32>
    %61 = vector.shape_cast %60 : vector<256xf32> to vector<1x256xf32>
    %cst_36 = arith.constant 8.000000e+00 : f32
    %62 = vector.broadcast %cst_36 : f32 to vector<1x256xf32>
    %63 = arith.divf %61, %62 : vector<1x256xf32>
    %64 = arith.mulf %59, %59 : vector<8x256xf32>
    %cst_37 = arith.constant dense<0.000000e+00> : vector<256xf32>
    %65 = vector.multi_reduction <add>, %64, %cst_37 [0] : vector<8x256xf32> to vector<256xf32>
    %66 = vector.shape_cast %65 : vector<256xf32> to vector<1x256xf32>
    %cst_38 = arith.constant 8.000000e+00 : f32
    %67 = vector.broadcast %cst_38 : f32 to vector<1x256xf32>
    %68 = arith.divf %66, %67 : vector<1x256xf32>
    %69 = arith.mulf %63, %63 : vector<1x256xf32>
    %70 = arith.subf %68, %69 : vector<1x256xf32>
    %71 = vector.broadcast %63 : vector<1x256xf32> to vector<8x256xf32>
    %72 = arith.subf %59, %71 : vector<8x256xf32>
    %cst_39 = arith.constant 9.99999974E-6 : f32
    %73 = vector.broadcast %cst_39 : f32 to vector<1x256xf32>
    %74 = arith.addf %70, %73 : vector<1x256xf32>
    %75 = math.rsqrt %74 : vector<1x256xf32>
    %76 = vector.broadcast %75 : vector<1x256xf32> to vector<8x256xf32>
    %77 = arith.mulf %72, %76 : vector<8x256xf32>
    %78 = vector.broadcast %22 : vector<1x256xf32> to vector<8x256xf32>
    %79 = arith.mulf %77, %78 : vector<8x256xf32>
    %80 = vector.broadcast %23 : vector<1x256xf32> to vector<8x256xf32>
    %81 = arith.addf %79, %80 : vector<8x256xf32>
    %cst_40 = arith.constant dense<0.000000e+00> : vector<8x128xf32>
    %82 = tpu.matmul %81, %9, %cst_40 {dimension_numbers = #tpu.dot_dimension_numbers<[1], [0], [0], [1], [0, 0, 1, 1], [], []>} : vector<8x256xf32>, vector<256x128xf32>, vector<8x128xf32> -> vector<8x128xf32>
    %83 = vector.broadcast %16 : vector<1x128xf32> to vector<8x128xf32>
    %84 = arith.addf %82, %83 : vector<8x128xf32>
    %85 = vector.extract_strided_slice %84 {offsets = [0, 0], sizes = [8, 64], strides = [1, 1]} : vector<8x128xf32> to vector<8x64xf32>
    %86 = vector.extract_strided_slice %84 {offsets = [0, 64], sizes = [8, 64], strides = [1, 1]} : vector<8x128xf32> to vector<8x64xf32>
    %cst_41 = arith.constant 5.000000e-01 : f32
    %87 = vector.broadcast %cst_41 : f32 to vector<8x64xf32>
    %88 = arith.mulf %87, %86 : vector<8x64xf32>
    %89 = math.exp %88 : vector<8x64xf32>
    %cst_42 = arith.constant 1.000000e+00 : f32
    %90 = vector.broadcast %cst_42 : f32 to vector<8x64xf32>
    %91 = arith.addf %90, %86 : vector<8x64xf32>
    %92 = arith.mulf %85, %85 : vector<8x64xf32>
    %93 = arith.subf %91, %92 : vector<8x64xf32>
    %94 = arith.mulf %89, %89 : vector<8x64xf32>
    %95 = arith.subf %93, %94 : vector<8x64xf32>
    %96 = vector.shape_cast %95 : vector<8x64xf32> to vector<1x8x64xf32>
    %cst_43 = arith.constant dense<0.000000e+00> : vector<1xf32>
    %97 = vector.multi_reduction <add>, %96, %cst_43 [1, 2] : vector<1x8x64xf32> to vector<1xf32>
    %98 = vector.shape_cast %97 : vector<1xf32> to vector<1x1x1xf32>
    %99 = vector.extract %98[0, 0, 0] : f32 from vector<1x1x1xf32>
    %cst_44 = arith.constant 5.000000e-01 : f32
    %100 = arith.mulf %cst_44, %99 : f32
    %101 = arith.mulf %1, %89 : vector<8x64xf32>
    %102 = arith.addf %85, %101 : vector<8x64xf32>
    %c0_45 = arith.constant 0 : index
    %c0_46 = arith.constant 0 : index
    %103 = vector.load %arg6[%c0_45, %c0_46] : memref<8x64xf32, #tpu.memory_space<vmem>>, vector<8x64xf32>
    tpu.vector_store %arg6[%c0_45, %c0_46], %102 {strides = array<i32>} : memref<8x64xf32, #tpu.memory_space<vmem>>, vector<8x64xf32>,
    %cst_47 = arith.constant dense<0.000000e+00> : vector<8x256xf32>
    %104 = tpu.matmul %102, %5, %cst_47 {dimension_numbers = #tpu.dot_dimension_numbers<[1], [0], [0], [1], [0, 0, 1, 1], [], []>} : vector<8x64xf32>, vector<64x256xf32>, vector<8x256xf32> -> vector<8x256xf32>
    %105 = vector.broadcast %17 : vector<1x256xf32> to vector<8x256xf32>
    %106 = arith.addf %104, %105 : vector<8x256xf32>
    %cst_48 = arith.constant 0.000000e+00 : f32
    %107 = vector.broadcast %cst_48 : f32 to vector<8x256xf32>
    %108 = arith.maximumf %106, %107 : vector<8x256xf32>
    %cst_49 = arith.constant dense<0.000000e+00> : vector<256xf32>
    %109 = vector.multi_reduction <add>, %108, %cst_49 [0] : vector<8x256xf32> to vector<256xf32>
    %110 = vector.shape_cast %109 : vector<256xf32> to vector<1x256xf32>
    %cst_50 = arith.constant 8.000000e+00 : f32
    %111 = vector.broadcast %cst_50 : f32 to vector<1x256xf32>
    %112 = arith.divf %110, %111 : vector<1x256xf32>
    %113 = arith.mulf %108, %108 : vector<8x256xf32>
    %cst_51 = arith.constant dense<0.000000e+00> : vector<256xf32>
    %114 = vector.multi_reduction <add>, %113, %cst_51 [0] : vector<8x256xf32> to vector<256xf32>
    %115 = vector.shape_cast %114 : vector<256xf32> to vector<1x256xf32>
    %cst_52 = arith.constant 8.000000e+00 : f32
    %116 = vector.broadcast %cst_52 : f32 to vector<1x256xf32>
    %117 = arith.divf %115, %116 : vector<1x256xf32>
    %118 = arith.mulf %112, %112 : vector<1x256xf32>
    %119 = arith.subf %117, %118 : vector<1x256xf32>
    %120 = vector.broadcast %112 : vector<1x256xf32> to vector<8x256xf32>
    %121 = arith.subf %108, %120 : vector<8x256xf32>
    %cst_53 = arith.constant 9.99999974E-6 : f32
    %122 = vector.broadcast %cst_53 : f32 to vector<1x256xf32>
    %123 = arith.addf %119, %122 : vector<1x256xf32>
    %124 = math.rsqrt %123 : vector<1x256xf32>
    %125 = vector.broadcast %124 : vector<1x256xf32> to vector<8x256xf32>
    %126 = arith.mulf %121, %125 : vector<8x256xf32>
    %127 = vector.broadcast %24 : vector<1x256xf32> to vector<8x256xf32>
    %128 = arith.mulf %126, %127 : vector<8x256xf32>
    %129 = vector.broadcast %25 : vector<1x256xf32> to vector<8x256xf32>
    %130 = arith.addf %128, %129 : vector<8x256xf32>
    %cst_54 = arith.constant dense<0.000000e+00> : vector<8x256xf32>
    %131 = tpu.matmul %130, %11, %cst_54 {dimension_numbers = #tpu.dot_dimension_numbers<[1], [0], [0], [1], [0, 0, 1, 1], [], []>} : vector<8x256xf32>, vector<256x256xf32>, vector<8x256xf32> -> vector<8x256xf32>
    %132 = vector.broadcast %18 : vector<1x256xf32> to vector<8x256xf32>
    %133 = arith.addf %131, %132 : vector<8x256xf32>
    %cst_55 = arith.constant 0.000000e+00 : f32
    %134 = vector.broadcast %cst_55 : f32 to vector<8x256xf32>
    %135 = arith.maximumf %133, %134 : vector<8x256xf32>
    %cst_56 = arith.constant dense<0.000000e+00> : vector<256xf32>
    %136 = vector.multi_reduction <add>, %135, %cst_56 [0] : vector<8x256xf32> to vector<256xf32>
    %137 = vector.shape_cast %136 : vector<256xf32> to vector<1x256xf32>
    %cst_57 = arith.constant 8.000000e+00 : f32
    %138 = vector.broadcast %cst_57 : f32 to vector<1x256xf32>
    %139 = arith.divf %137, %138 : vector<1x256xf32>
    %140 = arith.mulf %135, %135 : vector<8x256xf32>
    %cst_58 = arith.constant dense<0.000000e+00> : vector<256xf32>
    %141 = vector.multi_reduction <add>, %140, %cst_58 [0] : vector<8x256xf32> to vector<256xf32>
    %142 = vector.shape_cast %141 : vector<256xf32> to vector<1x256xf32>
    %cst_59 = arith.constant 8.000000e+00 : f32
    %143 = vector.broadcast %cst_59 : f32 to vector<1x256xf32>
    %144 = arith.divf %142, %143 : vector<1x256xf32>
    %145 = arith.mulf %139, %139 : vector<1x256xf32>
    %146 = arith.subf %144, %145 : vector<1x256xf32>
    %147 = vector.broadcast %139 : vector<1x256xf32> to vector<8x256xf32>
    %148 = arith.subf %135, %147 : vector<8x256xf32>
    %cst_60 = arith.constant 9.99999974E-6 : f32
    %149 = vector.broadcast %cst_60 : f32 to vector<1x256xf32>
    %150 = arith.addf %146, %149 : vector<1x256xf32>
    %151 = math.rsqrt %150 : vector<1x256xf32>
    %152 = vector.broadcast %151 : vector<1x256xf32> to vector<8x256xf32>
    %153 = arith.mulf %148, %152 : vector<8x256xf32>
    %154 = vector.broadcast %26 : vector<1x256xf32> to vector<8x256xf32>
    %155 = arith.mulf %153, %154 : vector<8x256xf32>
    %156 = vector.broadcast %27 : vector<1x256xf32> to vector<8x256xf32>
    %157 = arith.addf %155, %156 : vector<8x256xf32>
    %cst_61 = arith.constant dense<0.000000e+00> : vector<8x640xf32>
    %158 = tpu.matmul %157, %13, %cst_61 {dimension_numbers = #tpu.dot_dimension_numbers<[1], [0], [0], [1], [0, 0, 1, 1], [], []>} : vector<8x256xf32>, vector<256x640xf32>, vector<8x640xf32> -> vector<8x640xf32>
    %159 = vector.broadcast %19 : vector<1x640xf32> to vector<8x640xf32>
    %160 = arith.addf %158, %159 : vector<8x640xf32>
    %161 = arith.negf %160 : vector<8x640xf32>
    %162 = math.exp %161 : vector<8x640xf32>
    %cst_62 = arith.constant 1.000000e+00 : f32
    %163 = vector.broadcast %cst_62 : f32 to vector<8x640xf32>
    %164 = arith.addf %163, %162 : vector<8x640xf32>
    %165 = arith.divf %163, %164 : vector<8x640xf32>
    %c0_63 = arith.constant 0 : index
    %c0_64 = arith.constant 0 : index
    %166 = vector.load %arg7[%c0_63, %c0_64] : memref<8x640xf32, #tpu.memory_space<vmem>>, vector<8x640xf32>
    tpu.vector_store %arg7[%c0_63, %c0_64], %165 {strides = array<i32>} : memref<8x640xf32, #tpu.memory_space<vmem>>, vector<8x640xf32>,
    %167 = arith.subf %165, %0 : vector<8x640xf32>
    %168 = arith.mulf %167, %167 : vector<8x640xf32>
    %169 = vector.shape_cast %168 : vector<8x640xf32> to vector<1x8x640xf32>
    %cst_65 = arith.constant dense<0.000000e+00> : vector<1xf32>
    %170 = vector.multi_reduction <add>, %169, %cst_65 [1, 2] : vector<1x8x640xf32> to vector<1xf32>
    %171 = vector.shape_cast %170 : vector<1xf32> to vector<1x1x1xf32>
    %172 = vector.extract %171[0, 0, 0] : f32 from vector<1x1x1xf32>
    %cst_66 = arith.constant 1.95312503E-4 : f32
    %173 = arith.mulf %172, %cst_66 : f32
    %174 = arith.addf %100, %173 : f32
    %cst_67 = arith.constant 0.000000e+00 : f32
    %175 = arith.subf %cst_67, %174 : f32
    %c0_68 = arith.constant 0 : index
    %c0_69 = arith.constant 0 : index
    %176 = memref.load %arg5[%c0_68, %c0_69] : memref<1x1xf32, #tpu.memory_space<smem>>
    memref.store %175, %arg5[%c0_68, %c0_69] : memref<1x1xf32, #tpu.memory_space<smem>>
    return
  }
}

</mosaic_0001>

<llo_original>
// kernel: vae_forward.1
$region0: #{vae_forward.1}
  #allocation0 [shape = 'u32[]', space=smem, size = 0x4, offset = 0x4, fixed_abs, tag = 'smem constant byte address 0x4 - core index']
  #allocation1 [shape = 'u32[144,128]{1,0:T(1,128)}', space=vmem, size = 0x12000, scoped, tag = 'internal scratch']
  %s0 = inlined_call_operand.hbm [shape: f32[8,640], index: 0, kind: input, shape index: {}]
  %s1 = inlined_call_operand.hbm [shape: f32[8,64], index: 1, kind: input, shape index: {}]
  %s2 = inlined_call_operand.hbm [shape: bf16[704,256], index: 2, kind: input, shape index: {}]
  %s3 = inlined_call_operand.hbm [shape: bf16[256,1280], index: 3, kind: input, shape index: {}]
  %s4 = inlined_call_operand.hbm [shape: f32[14,640], index: 4, kind: input, shape index: {}]
  %s5 = inlined_call_operand.hbm [shape: f32[1,1], index: 5, kind: output, shape index: {0}]
  %s6 = inlined_call_operand.hbm [shape: f32[8,64], index: 6, kind: output, shape index: {1}]
  %s7 = inlined_call_operand.hbm [shape: f32[8,640], index: 7, kind: output, shape index: {2}]
  %8 = xla_tuple %s5, %s6, %s7
  %s9 = sld [smem:[#allocation0]]
  $region66: #{vae_forward.1} parent=0
    _
  %s11 = ssub.s32 1, %s9
  %s12 = scalar_select 0, %s11, %s9
  $region1: #{vae_forward.1} parent=0
    #allocation2 [shape = 'u8[20480]{0}', space=vmem, size = 0x5000, scoped, tag = 'input window, operand 0, single buffered']
    #allocation3 [shape = 's32[1]{0}', space=sflag, size = 0x4, scoped, tag = 'scoped memory for vae_forward.1']
    #allocation4 [shape = 's32[1]{0}', space=sflag, size = 0x4, scoped, tag = 'scoped memory for vae_forward.1']
    #allocation5 [shape = 's32[1]{0}', space=sflag, size = 0x4, scoped, tag = 'scoped memory for vae_forward.1']
    #allocation6 [shape = 'u8[4096]{0}', space=vmem, size = 0x1000, scoped, tag = 'input window, operand 1, single buffered']
    #allocation7 [shape = 's32[1]{0}', space=sflag, size = 0x4, scoped, tag = 'scoped memory for vae_forward.1']
    #allocation8 [shape = 'u8[360448]{0}', space=vmem, size = 0x58000, scoped, tag = 'input window, operand 2, single buffered']
    #allocation9 [shape = 'u8[655360]{0}', space=vmem, size = 0xa0000, scoped, tag = 'input window, operand 3, single buffered']
    #allocation10 [shape = 's32[1]{0}', space=sflag, size = 0x4, scoped, tag = 'scoped memory for vae_forward.1']
    #allocation11 [shape = 'u8[40960]{0}', space=vmem, size = 0xa000, scoped, tag = 'input window, operand 4, single buffered']
    #allocation12 [shape = 'u8[512]{0}', space=smem, size = 0x200, scoped, tag = 'output window, operand 0, single buffered']
    #allocation13 [shape = 'u8[4096]{0}', space=vmem, size = 0x1000, scoped, tag = 'output window, operand 1, single buffered']
    #allocation14 [shape = 'u8[20480]{0}', space=vmem, size = 0x5000, scoped, tag = 'output window, operand 2, single buffered']
    #allocation15 [shape = 's32[1]{0}', space=sflag, size = 0x4, scoped, tag = 'scoped memory for vae_forward.1']
    %13 = vsyncpa [#allocation3], 0
    %14 = vsyncpa [#allocation7], 0
    %15 = vsyncpa [#allocation10], 0
    %16 = vsyncpa [#allocation5], 0
    %17 = vsyncpa [#allocation4], 0
    %18 = vsyncpa [#allocation15], 0
    // Predicated region
    $region2: #{vae_forward.1} parent=1 // pred_check
      _
    $region3: #{vae_forward.1} parent=1 // pred_check_branch
      %20 = sbr.rel (0) target = $region5
    $region4: #{vae_forward.1} parent=1 // pred_region
      %s22 = ssub.s32 640, 640
      %23 = vsyncadd [#allocation3], %s22
      %s25 = sshll.u32 [#allocation2], 4
      %s26 = int_to_ptr.vmem [resolvable:$true] %s25
      %28 = dma.hbm_to_vmem [thread:$0]  %s0, 640, %s26, [#allocation3]
    $region5: #{vae_forward.1} parent=1 // pred_fallthru
      _
    // Predicated region
    $region6: #{vae_forward.1} parent=1 // pred_check
      _
    $region7: #{vae_forward.1} parent=1 // pred_check_branch
      %30 = sbr.rel (0) target = $region9
    $region8: #{vae_forward.1} parent=1 // pred_region
      %s32 = ssub.s32 128, 128
      %33 = vsyncadd [#allocation7], %s32
      %s35 = sshll.u32 [#allocation6], 4
      %s36 = int_to_ptr.vmem [resolvable:$true] %s35
      %38 = dma.hbm_to_vmem [thread:$0]  %s1, 128, %s36, [#allocation7]
    $region9: #{vae_forward.1} parent=1 // pred_fallthru
      _
    // Predicated region
    $region10: #{vae_forward.1} parent=1 // pred_check
      _
    $region11: #{vae_forward.1} parent=1 // pred_check_branch
      %40 = sbr.rel (0) target = $region13
    $region12: #{vae_forward.1} parent=1 // pred_region
      %s42 = ssub.s32 11264, 11264
      %43 = vsyncadd [#allocation7], %s42
      %s44 = sshll.u32 [#allocation8], 4
      %s45 = int_to_ptr.vmem [resolvable:$true] %s44
      %50 = dma.hbm_to_vmem [thread:$0]  %s2, 11264, %s45, [#allocation7], 128, 128, 8
    $region13: #{vae_forward.1} parent=1 // pred_fallthru
      _
    // Predicated region
    $region14: #{vae_forward.1} parent=1 // pred_check
      _
    $region15: #{vae_forward.1} parent=1 // pred_check_branch
      %52 = sbr.rel (0) target = $region17
    $region16: #{vae_forward.1} parent=1 // pred_region
      %s54 = ssub.s32 20480, 20480
      %55 = vsyncadd [#allocation10], %s54
      %s56 = sshll.u32 [#allocation9], 4
      %s57 = int_to_ptr.vmem [resolvable:$true] %s56
      %62 = dma.hbm_to_vmem [thread:$0]  %s3, 20480, %s57, [#allocation10], 640, 640, 40
    $region17: #{vae_forward.1} parent=1 // pred_fallthru
      _
    // Predicated region
    $region18: #{vae_forward.1} parent=1 // pred_check
      _
    $region19: #{vae_forward.1} parent=1 // pred_check_branch
      %64 = sbr.rel (0) target = $region21
    $region20: #{vae_forward.1} parent=1 // pred_region
      %s66 = ssub.s32 1280, 1280
      %67 = vsyncadd [#allocation10], %s66
      %s68 = sshll.u32 [#allocation11], 4
      %s69 = int_to_ptr.vmem [resolvable:$true] %s68
      %74 = dma.hbm_to_vmem [thread:$0]  %s4, 1280, %s69, [#allocation10], 640, 640, 40
    $region21: #{vae_forward.1} parent=1 // pred_fallthru
      _
    // Predicated region
    $region22: #{vae_forward.1} parent=1 // pred_check
      _
    $region23: #{vae_forward.1} parent=1 // pred_check_branch
      %76 = sbr.rel (0) target = $region25
    $region24: #{vae_forward.1} parent=1 // pred_region
      %77 = dma.done [#allocation3], 640
    $region25: #{vae_forward.1} parent=1 // pred_fallthru
      _
    // Predicated region
    $region26: #{vae_forward.1} parent=1 // pred_check
      _
    $region27: #{vae_forward.1} parent=1 // pred_check_branch
      %79 = sbr.rel (0) target = $region29
    $region28: #{vae_forward.1} parent=1 // pred_region
      %80 = dma.done [#allocation7], 128
    $region29: #{vae_forward.1} parent=1 // pred_fallthru
      _
    // Predicated region
    $region30: #{vae_forward.1} parent=1 // pred_check
      _
    $region31: #{vae_forward.1} parent=1 // pred_check_branch
      %82 = sbr.rel (0) target = $region33
    $region32: #{vae_forward.1} parent=1 // pred_region
      %83 = dma.done [#allocation7], 11264
    $region33: #{vae_forward.1} parent=1 // pred_fallthru
      _
    // Predicated region
    $region34: #{vae_forward.1} parent=1 // pred_check
      _
    $region35: #{vae_forward.1} parent=1 // pred_check_branch
      %85 = sbr.rel (0) target = $region37
    $region36: #{vae_forward.1} parent=1 // pred_region
      %86 = dma.done [#allocation10], 20480
    $region37: #{vae_forward.1} parent=1 // pred_fallthru
      _
    // Predicated region
    $region38: #{vae_forward.1} parent=1 // pred_check
      _
    $region39: #{vae_forward.1} parent=1 // pred_check_branch
      %88 = sbr.rel (0) target = $region41
    $region40: #{vae_forward.1} parent=1 // pred_region
      %89 = dma.done [#allocation10], 1280
    $region41: #{vae_forward.1} parent=1 // pred_fallthru
      _
    %v90 = vld [vmem:[#allocation2] sm:$0xff]
    %v91 = vld [vmem:[#allocation2 + $0x8] sm:$0xff]
    %v92 = vld [vmem:[#allocation2 + $0x10] sm:$0xff]
    %v93 = vld [vmem:[#allocation2 + $0x18] sm:$0xff]
    %v94 = vld [vmem:[#allocation2 + $0x20] sm:$0xff]
    %v95 = vld [vmem:[#allocation6] sm:$0xff]
    %v96 = vld [vmem:[#allocation8] sm:$0xff]
    %v97 = vld [vmem:[#allocation8 + $0x8] sm:$0xff]
    %v98 = vld [vmem:[#allocation8 + $0x10] sm:$0xff]
    %v99 = vld [vmem:[#allocation8 + $0x18] sm:$0xff]
    %v100 = vld [vmem:[#allocation8 + $0x20] sm:$0xff]
    %v101 = vld [vmem:[#allocation8 + $0x28] sm:$0xff]
    %v102 = vld [vmem:[#allocation8 + $0x30] sm:$0xff]
    %v103 = vld [vmem:[#allocation8 + $0x38] sm:$0xff]
    %v104 = vld [vmem:[#allocation8 + $0x40] sm:$0xff]
    %v105 = vld [vmem:[#allocation8 + $0x48] sm:$0xff]
    %v106 = vld [vmem:[#allocation8 + $0x50] sm:$0xff]
    %v107 = vld [vmem:[#allocation8 + $0x58] sm:$0xff]
    %v108 = vld [vmem:[#allocation8 + $0x60] sm:$0xff]
    %v109 = vld [vmem:[#allocation8 + $0x68] sm:$0xff]
    %v110 = vld [vmem:[#allocation8 + $0x70] sm:$0xff]
    %v111 = vld [vmem:[#allocation8 + $0x78] sm:$0xff]
    %v112 = vld [vmem:[#allocation8 + $0x80] sm:$0xff]
    %v113 = vld [vmem:[#allocation8 + $0x88] sm:$0xff]
    %v114 = vld [vmem:[#allocation8 + $0x90] sm:$0xff]
    %v115 = vld [vmem:[#allocation8 + $0x98] sm:$0xff]
    %v116 = vld [vmem:[#allocation8 + $0xa0] sm:$0xff]
    %v117 = vld [vmem:[#allocation8 + $0xa8] sm:$0xff]
    %v118 = vld [vmem:[#allocation8 + $0xb0] sm:$0xff]
    %v119 = vld [vmem:[#allocation8 + $0xb8] sm:$0xff]
    %v120 = vld [vmem:[#allocation8 + $0xc0] sm:$0xff]
    %v121 = vld [vmem:[#allocation8 + $0xc8] sm:$0xff]
    %v122 = vld [vmem:[#allocation8 + $0xd0] sm:$0xff]
    %v123 = vld [vmem:[#allocation8 + $0xd8] sm:$0xff]
    %v124 = vld [vmem:[#allocation8 + $0xe0] sm:$0xff]
    %v125 = vld [vmem:[#allocation8 + $0xe8] sm:$0xff]
    %v126 = vld [vmem:[#allocation8 + $0xf0] sm:$0xff]
    %v127 = vld [vmem:[#allocation8 + $0xf8] sm:$0xff]
    %v128 = vld [vmem:[#allocation8 + $0x100] sm:$0xff]
    %v129 = vld [vmem:[#allocation8 + $0x108] sm:$0xff]
    %v130 = vld [vmem:[#allocation8 + $0x110] sm:$0xff]
    %v131 = vld [vmem:[#allocation8 + $0x118] sm:$0xff]
    %v132 = vld [vmem:[#allocation8 + $0x120] sm:$0xff]
    %v133 = vld [vmem:[#allocation8 + $0x128] sm:$0xff]
    %v134 = vld [vmem:[#allocation8 + $0x130] sm:$0xff]
    %v135 = vld [vmem:[#allocation8 + $0x138] sm:$0xff]
    %v136 = vld [vmem:[#allocation8 + $0x140] sm:$0xff]
    %v137 = vld [vmem:[#allocation8 + $0x148] sm:$0xff]
    %v138 = vld [vmem:[#allocation8 + $0x150] sm:$0xff]
    %v139 = vld [vmem:[#allocation8 + $0x158] sm:$0xff]
    %v140 = vld [vmem:[#allocation8 + $0x160] sm:$0xff]
    %v141 = vld [vmem:[#allocation8 + $0x168] sm:$0xff]
    %v142 = vld [vmem:[#allocation8 + $0x170] sm:$0xff]
    %v143 = vld [vmem:[#allocation8 + $0x178] sm:$0xff]
    %v144 = vld [vmem:[#allocation8 + $0x180] sm:$0xff]
    %v145 = vld [vmem:[#allocation8 + $0x188] sm:$0xff]
    %v146 = vld [vmem:[#allocation8 + $0x190] sm:$0xff]
    %v147 = vld [vmem:[#allocation8 + $0x198] sm:$0xff]
    %v148 = vld [vmem:[#allocation8 + $0x1a0] sm:$0xff]
    %v149 = vld [vmem:[#allocation8 + $0x1a8] sm:$0xff]
    %v150 = vld [vmem:[#allocation8 + $0x1b0] sm:$0xff]
    %v151 = vld [vmem:[#allocation8 + $0x1b8] sm:$0xff]
    %v152 = vld [vmem:[#allocation8 + $0x1c0] sm:$0xff]
    %v153 = vld [vmem:[#allocation8 + $0x1c8] sm:$0xff]
    %v154 = vld [vmem:[#allocation8 + $0x1d0] sm:$0xff]
    %v155 = vld [vmem:[#allocation8 + $0x1d8] sm:$0xff]
    %v156 = vld [vmem:[#allocation8 + $0x1e0] sm:$0xff]
    %v157 = vld [vmem:[#allocation8 + $0x1e8] sm:$0xff]
    %v158 = vld [vmem:[#allocation8 + $0x1f0] sm:$0xff]
    %v159 = vld [vmem:[#allocation8 + $0x1f8] sm:$0xff]
    %v160 = vld [vmem:[#allocation8 + $0x200] sm:$0xff]
    %v161 = vld [vmem:[#allocation8 + $0x208] sm:$0xff]
    %v162 = vld [vmem:[#allocation8 + $0x210] sm:$0xff]
    %v163 = vld [vmem:[#allocation8 + $0x218] sm:$0xff]
    %v164 = vld [vmem:[#allocation8 + $0x220] sm:$0xff]
    %v165 = vld [vmem:[#allocation8 + $0x228] sm:$0xff]
    %v166 = vld [vmem:[#allocation8 + $0x230] sm:$0xff]
    %v167 = vld [vmem:[#allocation8 + $0x238] sm:$0xff]
    %v168 = vld [vmem:[#allocation8 + $0x240] sm:$0xff]
    %v169 = vld [vmem:[#allocation8 + $0x248] sm:$0xff]
    %v170 = vld [vmem:[#allocation8 + $0x250] sm:$0xff]
    %v171 = vld [vmem:[#allocation8 + $0x258] sm:$0xff]
    %v172 = vld [vmem:[#allocation8 + $0x260] sm:$0xff]
    %v173 = vld [vmem:[#allocation8 + $0x268] sm:$0xff]
    %v174 = vld [vmem:[#allocation8 + $0x270] sm:$0xff]
    %v175 = vld [vmem:[#allocation8 + $0x278] sm:$0xff]
    %v176 = vunpack.c.l.bf16 %v96
    %v177 = vunpack.c.h.bf16 %v96
    %v178 = vunpack.c.l.bf16 %v97
    %v179 = vunpack.c.h.bf16 %v97
    %v180 = vunpack.c.l.bf16 %v98
    %v181 = vunpack.c.h.bf16 %v98
    %v182 = vunpack.c.l.bf16 %v99
    %v183 = vunpack.c.h.bf16 %v99
    %v184 = vunpack.c.l.bf16 %v100
    %v185 = vunpack.c.h.bf16 %v100
    %v186 = vunpack.c.l.bf16 %v101
    %v187 = vunpack.c.h.bf16 %v101
    %v188 = vunpack.c.l.bf16 %v102
    %v189 = vunpack.c.h.bf16 %v102
    %v190 = vunpack.c.l.bf16 %v103
    %v191 = vunpack.c.h.bf16 %v103
    %v192 = vunpack.c.l.bf16 %v104
    %v193 = vunpack.c.h.bf16 %v104
    %v194 = vunpack.c.l.bf16 %v105
    %v195 = vunpack.c.h.bf16 %v105
    %v196 = vunpack.c.l.bf16 %v106
    %v197 = vunpack.c.h.bf16 %v106
    %v198 = vunpack.c.l.bf16 %v107
    %v199 = vunpack.c.h.bf16 %v107
    %v200 = vunpack.c.l.bf16 %v108
    %v201 = vunpack.c.h.bf16 %v108
    %v202 = vunpack.c.l.bf16 %v109
    %v203 = vunpack.c.h.bf16 %v109
    %v204 = vunpack.c.l.bf16 %v110
    %v205 = vunpack.c.h.bf16 %v110
    %v206 = vunpack.c.l.bf16 %v111
    %v207 = vunpack.c.h.bf16 %v111
    %v208 = vunpack.c.l.bf16 %v112
    %v209 = vunpack.c.h.bf16 %v112
    %v210 = vunpack.c.l.bf16 %v113
    %v211 = vunpack.c.h.bf16 %v113
    %v212 = vunpack.c.l.bf16 %v114
    %v213 = vunpack.c.h.bf16 %v114
    %v214 = vunpack.c.l.bf16 %v115
    %v215 = vunpack.c.h.bf16 %v115
    %v216 = vunpack.c.l.bf16 %v116
    %v217 = vunpack.c.h.bf16 %v116
    %v218 = vunpack.c.l.bf16 %v117
    %v219 = vunpack.c.h.bf16 %v117
    %v220 = vunpack.c.l.bf16 %v118
    %v221 = vunpack.c.h.bf16 %v118
    %v222 = vunpack.c.l.bf16 %v119
    %v223 = vunpack.c.h.bf16 %v119
    %v224 = vunpack.c.l.bf16 %v120
    %v225 = vunpack.c.h.bf16 %v120
    %v226 = vunpack.c.l.bf16 %v121
    %v227 = vunpack.c.h.bf16 %v121
    %v228 = vunpack.c.l.bf16 %v122
    %v229 = vunpack.c.h.bf16 %v122
    %v230 = vunpack.c.l.bf16 %v123
    %v231 = vunpack.c.h.bf16 %v123
    %v232 = vunpack.c.l.bf16 %v124
    %v233 = vunpack.c.h.bf16 %v124
    %v234 = vunpack.c.l.bf16 %v125
    %v235 = vunpack.c.h.bf16 %v125
    %v236 = vunpack.c.l.bf16 %v126
    %v237 = vunpack.c.h.bf16 %v126
    %v238 = vunpack.c.l.bf16 %v127
    %v239 = vunpack.c.h.bf16 %v127
    %v240 = vunpack.c.l.bf16 %v128
    %v241 = vunpack.c.h.bf16 %v128
    %v242 = vunpack.c.l.bf16 %v129
    %v243 = vunpack.c.h.bf16 %v129
    %v244 = vunpack.c.l.bf16 %v130
    %v245 = vunpack.c.h.bf16 %v130
    %v246 = vunpack.c.l.bf16 %v131
    %v247 = vunpack.c.h.bf16 %v131
    %v248 = vunpack.c.l.bf16 %v132
    %v249 = vunpack.c.h.bf16 %v132
    %v250 = vunpack.c.l.bf16 %v133
    %v251 = vunpack.c.h.bf16 %v133
    %v252 = vunpack.c.l.bf16 %v134
    %v253 = vunpack.c.h.bf16 %v134
    %v254 = vunpack.c.l.bf16 %v135
    %v255 = vunpack.c.h.bf16 %v135
    %v256 = vunpack.c.l.bf16 %v136
    %v257 = vunpack.c.h.bf16 %v136
    %v258 = vunpack.c.l.bf16 %v137
    %v259 = vunpack.c.h.bf16 %v137
    %v260 = vunpack.c.l.bf16 %v138
    %v261 = vunpack.c.h.bf16 %v138
    %v262 = vunpack.c.l.bf16 %v139
    %v263 = vunpack.c.h.bf16 %v139
    %v264 = vunpack.c.l.bf16 %v140
    %v265 = vunpack.c.h.bf16 %v140
    %v266 = vunpack.c.l.bf16 %v141
    %v267 = vunpack.c.h.bf16 %v141
    %v268 = vunpack.c.l.bf16 %v142
    %v269 = vunpack.c.h.bf16 %v142
    %v270 = vunpack.c.l.bf16 %v143
    %v271 = vunpack.c.h.bf16 %v143
    %v272 = vunpack.c.l.bf16 %v144
    %v273 = vunpack.c.h.bf16 %v144
    %v274 = vunpack.c.l.bf16 %v145
    %v275 = vunpack.c.h.bf16 %v145
    %v276 = vunpack.c.l.bf16 %v146
    %v277 = vunpack.c.h.bf16 %v146
    %v278 = vunpack.c.l.bf16 %v147
    %v279 = vunpack.c.h.bf16 %v147
    %v280 = vunpack.c.l.bf16 %v148
    %v281 = vunpack.c.h.bf16 %v148
    %v282 = vunpack.c.l.bf16 %v149
    %v283 = vunpack.c.h.bf16 %v149
    %v284 = vunpack.c.l.bf16 %v150
    %v285 = vunpack.c.h.bf16 %v150
    %v286 = vunpack.c.l.bf16 %v151
    %v287 = vunpack.c.h.bf16 %v151
    %v288 = vunpack.c.l.bf16 %v152
    %v289 = vunpack.c.h.bf16 %v152
    %v290 = vunpack.c.l.bf16 %v153
    %v291 = vunpack.c.h.bf16 %v153
    %v292 = vunpack.c.l.bf16 %v154
    %v293 = vunpack.c.h.bf16 %v154
    %v294 = vunpack.c.l.bf16 %v155
    %v295 = vunpack.c.h.bf16 %v155
    %v296 = vunpack.c.l.bf16 %v156
    %v297 = vunpack.c.h.bf16 %v156
    %v298 = vunpack.c.l.bf16 %v157
    %v299 = vunpack.c.h.bf16 %v157
    %v300 = vunpack.c.l.bf16 %v158
    %v301 = vunpack.c.h.bf16 %v158
    %v302 = vunpack.c.l.bf16 %v159
    %v303 = vunpack.c.h.bf16 %v159
    %v304 = vunpack.c.l.bf16 %v160
    %v305 = vunpack.c.h.bf16 %v160
    %v306 = vunpack.c.l.bf16 %v161
    %v307 = vunpack.c.h.bf16 %v161
    %v308 = vunpack.c.l.bf16 %v162
    %v309 = vunpack.c.h.bf16 %v162
    %v310 = vunpack.c.l.bf16 %v163
    %v311 = vunpack.c.h.bf16 %v163
    %v312 = vunpack.c.l.bf16 %v164
    %v313 = vunpack.c.h.bf16 %v164
    %v314 = vunpack.c.l.bf16 %v165
    %v315 = vunpack.c.h.bf16 %v165
    %v316 = vunpack.c.l.bf16 %v166
    %v317 = vunpack.c.h.bf16 %v166
    %v318 = vunpack.c.l.bf16 %v167
    %v319 = vunpack.c.h.bf16 %v167
    %v320 = vunpack.c.l.bf16 %v168
    %v321 = vunpack.c.h.bf16 %v168
    %v322 = vunpack.c.l.bf16 %v169
    %v323 = vunpack.c.h.bf16 %v169
    %v324 = vunpack.c.l.bf16 %v170
    %v325 = vunpack.c.h.bf16 %v170
    %v326 = vunpack.c.l.bf16 %v171
    %v327 = vunpack.c.h.bf16 %v171
    %v328 = vunpack.c.l.bf16 %v172
    %v329 = vunpack.c.h.bf16 %v172
    %v330 = vunpack.c.l.bf16 %v173
    %v331 = vunpack.c.h.bf16 %v173
    %v332 = vunpack.c.l.bf16 %v174
    %v333 = vunpack.c.h.bf16 %v174
    %v334 = vunpack.c.l.bf16 %v175
    %v335 = vunpack.c.h.bf16 %v175
    %v336 = vld [vmem:[#allocation8 + $0x280] sm:$0xff]
    %v337 = vld [vmem:[#allocation8 + $0x288] sm:$0xff]
    %v338 = vld [vmem:[#allocation8 + $0x290] sm:$0xff]
    %v339 = vld [vmem:[#allocation8 + $0x298] sm:$0xff]
    %v340 = vld [vmem:[#allocation8 + $0x2a0] sm:$0xff]
    %v341 = vld [vmem:[#allocation8 + $0x2a8] sm:$0xff]
    %v342 = vld [vmem:[#allocation8 + $0x2b0] sm:$0xff]
    %v343 = vld [vmem:[#allocation8 + $0x2b8] sm:$0xff]
    %v344 = vunpack.c.l.bf16 %v336
    %v345 = vunpack.c.h.bf16 %v336
    %v346 = vunpack.c.l.bf16 %v337
    %v347 = vunpack.c.h.bf16 %v337
    %v348 = vunpack.c.l.bf16 %v338
    %v349 = vunpack.c.h.bf16 %v338
    %v350 = vunpack.c.l.bf16 %v339
    %v351 = vunpack.c.h.bf16 %v339
    %v352 = vunpack.c.l.bf16 %v340
    %v353 = vunpack.c.h.bf16 %v340
    %v354 = vunpack.c.l.bf16 %v341
    %v355 = vunpack.c.h.bf16 %v341
    %v356 = vunpack.c.l.bf16 %v342
    %v357 = vunpack.c.h.bf16 %v342
    %v358 = vunpack.c.l.bf16 %v343
    %v359 = vunpack.c.h.bf16 %v343
    %v360 = vld [vmem:[#allocation9] sm:$0xff]
    %v361 = vld [vmem:[#allocation9 + $0x28] sm:$0xff]
    %v362 = vld [vmem:[#allocation9 + $0x50] sm:$0xff]
    %v363 = vld [vmem:[#allocation9 + $0x78] sm:$0xff]
    %v364 = vld [vmem:[#allocation9 + $0xa0] sm:$0xff]
    %v365 = vld [vmem:[#allocation9 + $0xc8] sm:$0xff]
    %v366 = vld [vmem:[#allocation9 + $0xf0] sm:$0xff]
    %v367 = vld [vmem:[#allocation9 + $0x118] sm:$0xff]
    %v368 = vld [vmem:[#allocation9 + $0x140] sm:$0xff]
    %v369 = vld [vmem:[#allocation9 + $0x168] sm:$0xff]
    %v370 = vld [vmem:[#allocation9 + $0x190] sm:$0xff]
    %v371 = vld [vmem:[#allocation9 + $0x1b8] sm:$0xff]
    %v372 = vld [vmem:[#allocation9 + $0x1e0] sm:$0xff]
    %v373 = vld [vmem:[#allocation9 + $0x208] sm:$0xff]
    %v374 = vld [vmem:[#allocation9 + $0x230] sm:$0xff]
    %v375 = vld [vmem:[#allocation9 + $0x258] sm:$0xff]
    %v376 = vld [vmem:[#allocation9 + $0x280] sm:$0xff]
    %v377 = vld [vmem:[#allocation9 + $0x2a8] sm:$0xff]
    %v378 = vld [vmem:[#allocation9 + $0x2d0] sm:$0xff]
    %v379 = vld [vmem:[#allocation9 + $0x2f8] sm:$0xff]
    %v380 = vld [vmem:[#allocation9 + $0x320] sm:$0xff]
    %v381 = vld [vmem:[#allocation9 + $0x348] sm:$0xff]
    %v382 = vld [vmem:[#allocation9 + $0x370] sm:$0xff]
    %v383 = vld [vmem:[#allocation9 + $0x398] sm:$0xff]
    %v384 = vld [vmem:[#allocation9 + $0x3c0] sm:$0xff]
    %v385 = vld [vmem:[#allocation9 + $0x3e8] sm:$0xff]
    %v386 = vld [vmem:[#allocation9 + $0x410] sm:$0xff]
    %v387 = vld [vmem:[#allocation9 + $0x438] sm:$0xff]
    %v388 = vld [vmem:[#allocation9 + $0x460] sm:$0xff]
    %v389 = vld [vmem:[#allocation9 + $0x488] sm:$0xff]
    %v390 = vld [vmem:[#allocation9 + $0x4b0] sm:$0xff]
    %v391 = vld [vmem:[#allocation9 + $0x4d8] sm:$0xff]
    %v392 = vunpack.c.l.bf16 %v360
    %v393 = vunpack.c.h.bf16 %v360
    %v394 = vunpack.c.l.bf16 %v361
    %v395 = vunpack.c.h.bf16 %v361
    %v396 = vunpack.c.l.bf16 %v362
    %v397 = vunpack.c.h.bf16 %v362
    %v398 = vunpack.c.l.bf16 %v363
    %v399 = vunpack.c.h.bf16 %v363
    %v400 = vunpack.c.l.bf16 %v364
    %v401 = vunpack.c.h.bf16 %v364
    %v402 = vunpack.c.l.bf16 %v365
    %v403 = vunpack.c.h.bf16 %v365
    %v404 = vunpack.c.l.bf16 %v366
    %v405 = vunpack.c.h.bf16 %v366
    %v406 = vunpack.c.l.bf16 %v367
    %v407 = vunpack.c.h.bf16 %v367
    %v408 = vunpack.c.l.bf16 %v368
    %v409 = vunpack.c.h.bf16 %v368
    %v410 = vunpack.c.l.bf16 %v369
    %v411 = vunpack.c.h.bf16 %v369
    %v412 = vunpack.c.l.bf16 %v370
    %v413 = vunpack.c.h.bf16 %v370
    %v414 = vunpack.c.l.bf16 %v371
    %v415 = vunpack.c.h.bf16 %v371
    %v416 = vunpack.c.l.bf16 %v372
    %v417 = vunpack.c.h.bf16 %v372
    %v418 = vunpack.c.l.bf16 %v373
    %v419 = vunpack.c.h.bf16 %v373
    %v420 = vunpack.c.l.bf16 %v374
    %v421 = vunpack.c.h.bf16 %v374
    %v422 = vunpack.c.l.bf16 %v375
    %v423 = vunpack.c.h.bf16 %v375
    %v424 = vunpack.c.l.bf16 %v376
    %v425 = vunpack.c.h.bf16 %v376
    %v426 = vunpack.c.l.bf16 %v377
    %v427 = vunpack.c.h.bf16 %v377
    %v428 = vunpack.c.l.bf16 %v378
    %v429 = vunpack.c.h.bf16 %v378
    %v430 = vunpack.c.l.bf16 %v379
    %v431 = vunpack.c.h.bf16 %v379
    %v432 = vunpack.c.l.bf16 %v380
    %v433 = vunpack.c.h.bf16 %v380
    %v434 = vunpack.c.l.bf16 %v381
    %v435 = vunpack.c.h.bf16 %v381
    %v436 = vunpack.c.l.bf16 %v382
    %v437 = vunpack.c.h.bf16 %v382
    %v438 = vunpack.c.l.bf16 %v383
    %v439 = vunpack.c.h.bf16 %v383
    %v440 = vunpack.c.l.bf16 %v384
    %v441 = vunpack.c.h.bf16 %v384
    %v442 = vunpack.c.l.bf16 %v385
    %v443 = vunpack.c.h.bf16 %v385
    %v444 = vunpack.c.l.bf16 %v386
    %v445 = vunpack.c.h.bf16 %v386
    %v446 = vunpack.c.l.bf16 %v387
    %v447 = vunpack.c.h.bf16 %v387
    %v448 = vunpack.c.l.bf16 %v388
    %v449 = vunpack.c.h.bf16 %v388
    %v450 = vunpack.c.l.bf16 %v389
    %v451 = vunpack.c.h.bf16 %v389
    %v452 = vunpack.c.l.bf16 %v390
    %v453 = vunpack.c.h.bf16 %v390
    %v454 = vunpack.c.l.bf16 %v391
    %v455 = vunpack.c.h.bf16 %v391
    %v456 = vld [vmem:[#allocation9 + $0x8] sm:$0xf]
    %v457 = vld [vmem:[#allocation9 + $0x30] sm:$0xf]
    %v458 = vld [vmem:[#allocation9 + $0x58] sm:$0xf]
    %v459 = vld [vmem:[#allocation9 + $0x80] sm:$0xf]
    %v460 = vld [vmem:[#allocation9 + $0xa8] sm:$0xf]
    %v461 = vld [vmem:[#allocation9 + $0xd0] sm:$0xf]
    %v462 = vld [vmem:[#allocation9 + $0xf8] sm:$0xf]
    %v463 = vld [vmem:[#allocation9 + $0x120] sm:$0xf]
    %v464 = vld [vmem:[#allocation9 + $0x148] sm:$0xf]
    %v465 = vld [vmem:[#allocation9 + $0x170] sm:$0xf]
    %v466 = vld [vmem:[#allocation9 + $0x198] sm:$0xf]
    %v467 = vld [vmem:[#allocation9 + $0x1c0] sm:$0xf]
    %v468 = vld [vmem:[#allocation9 + $0x1e8] sm:$0xf]
    %v469 = vld [vmem:[#allocation9 + $0x210] sm:$0xf]
    %v470 = vld [vmem:[#allocation9 + $0x238] sm:$0xf]
    %v471 = vld [vmem:[#allocation9 + $0x260] sm:$0xf]
    %v472 = vld [vmem:[#allocation9 + $0x288] sm:$0xf]
    %v473 = vld [vmem:[#allocation9 + $0x2b0] sm:$0xf]
    %v474 = vld [vmem:[#allocation9 + $0x2d8] sm:$0xf]
    %v475 = vld [vmem:[#allocation9 + $0x300] sm:$0xf]
    %v476 = vld [vmem:[#allocation9 + $0x328] sm:$0xf]
    %v477 = vld [vmem:[#allocation9 + $0x350] sm:$0xf]
    %v478 = vld [vmem:[#allocation9 + $0x378] sm:$0xf]
    %v479 = vld [vmem:[#allocation9 + $0x3a0] sm:$0xf]
    %v480 = vld [vmem:[#allocation9 + $0x3c8] sm:$0xf]
    %v481 = vld [vmem:[#allocation9 + $0x3f0] sm:$0xf]
    %v482 = vld [vmem:[#allocation9 + $0x418] sm:$0xf]
    %v483 = vld [vmem:[#allocation9 + $0x440] sm:$0xf]
    %v484 = vld [vmem:[#allocation9 + $0x468] sm:$0xf]
    %v485 = vld [vmem:[#allocation9 + $0x490] sm:$0xf]
    %v486 = vld [vmem:[#allocation9 + $0x4b8] sm:$0xf]
    %v487 = vld [vmem:[#allocation9 + $0x4e0] sm:$0xf]
    %v488 = vunpack.c.l.bf16 %v456
    %v489 = vunpack.c.l.bf16 %v457
    %v490 = vunpack.c.l.bf16 %v458
    %v491 = vunpack.c.l.bf16 %v459
    %v492 = vunpack.c.l.bf16 %v460
    %v493 = vunpack.c.l.bf16 %v461
    %v494 = vunpack.c.l.bf16 %v462
    %v495 = vunpack.c.l.bf16 %v463
    %v496 = vunpack.c.l.bf16 %v464
    %v497 = vunpack.c.l.bf16 %v465
    %v498 = vunpack.c.l.bf16 %v466
    %v499 = vunpack.c.l.bf16 %v467
    %v500 = vunpack.c.l.bf16 %v468
    %v501 = vunpack.c.l.bf16 %v469
    %v502 = vunpack.c.l.bf16 %v470
    %v503 = vunpack.c.l.bf16 %v471
    %v504 = vunpack.c.l.bf16 %v472
    %v505 = vunpack.c.l.bf16 %v473
    %v506 = vunpack.c.l.bf16 %v474
    %v507 = vunpack.c.l.bf16 %v475
    %v508 = vunpack.c.l.bf16 %v476
    %v509 = vunpack.c.l.bf16 %v477
    %v510 = vunpack.c.l.bf16 %v478
    %v511 = vunpack.c.l.bf16 %v479
    %v512 = vunpack.c.l.bf16 %v480
    %v513 = vunpack.c.l.bf16 %v481
    %v514 = vunpack.c.l.bf16 %v482
    %v515 = vunpack.c.l.bf16 %v483
    %v516 = vunpack.c.l.bf16 %v484
    %v517 = vunpack.c.l.bf16 %v485
    %v518 = vunpack.c.l.bf16 %v486
    %v519 = vunpack.c.l.bf16 %v487
    %v520 = vld [vmem:[#allocation9 + $0xc] sm:$0xff]
    %v521 = vld [vmem:[#allocation9 + $0x34] sm:$0xff]
    %v522 = vld [vmem:[#allocation9 + $0x5c] sm:$0xff]
    %v523 = vld [vmem:[#allocation9 + $0x84] sm:$0xff]
    %v524 = vld [vmem:[#allocation9 + $0xac] sm:$0xff]
    %v525 = vld [vmem:[#allocation9 + $0xd4] sm:$0xff]
    %v526 = vld [vmem:[#allocation9 + $0xfc] sm:$0xff]
    %v527 = vld [vmem:[#allocation9 + $0x124] sm:$0xff]
    %v528 = vld [vmem:[#allocation9 + $0x14c] sm:$0xff]
    %v529 = vld [vmem:[#allocation9 + $0x174] sm:$0xff]
    %v530 = vld [vmem:[#allocation9 + $0x19c] sm:$0xff]
    %v531 = vld [vmem:[#allocation9 + $0x1c4] sm:$0xff]
    %v532 = vld [vmem:[#allocation9 + $0x1ec] sm:$0xff]
    %v533 = vld [vmem:[#allocation9 + $0x214] sm:$0xff]
    %v534 = vld [vmem:[#allocation9 + $0x23c] sm:$0xff]
    %v535 = vld [vmem:[#allocation9 + $0x264] sm:$0xff]
    %v536 = vld [vmem:[#allocation9 + $0x28c] sm:$0xff]
    %v537 = vld [vmem:[#allocation9 + $0x2b4] sm:$0xff]
    %v538 = vld [vmem:[#allocation9 + $0x2dc] sm:$0xff]
    %v539 = vld [vmem:[#allocation9 + $0x304] sm:$0xff]
    %v540 = vld [vmem:[#allocation9 + $0x32c] sm:$0xff]
    %v541 = vld [vmem:[#allocation9 + $0x354] sm:$0xff]
    %v542 = vld [vmem:[#allocation9 + $0x37c] sm:$0xff]
    %v543 = vld [vmem:[#allocation9 + $0x3a4] sm:$0xff]
    %v544 = vld [vmem:[#allocation9 + $0x3cc] sm:$0xff]
    %v545 = vld [vmem:[#allocation9 + $0x3f4] sm:$0xff]
    %v546 = vld [vmem:[#allocation9 + $0x41c] sm:$0xff]
    %v547 = vld [vmem:[#allocation9 + $0x444] sm:$0xff]
    %v548 = vld [vmem:[#allocation9 + $0x46c] sm:$0xff]
    %v549 = vld [vmem:[#allocation9 + $0x494] sm:$0xff]
    %v550 = vld [vmem:[#allocation9 + $0x4bc] sm:$0xff]
    %v551 = vld [vmem:[#allocation9 + $0x4e4] sm:$0xff]
    %v552 = vunpack.c.l.bf16 %v520
    %v553 = vunpack.c.h.bf16 %v520
    %v554 = vunpack.c.l.bf16 %v521
    %v555 = vunpack.c.h.bf16 %v521
    %v556 = vunpack.c.l.bf16 %v522
    %v557 = vunpack.c.h.bf16 %v522
    %v558 = vunpack.c.l.bf16 %v523
    %v559 = vunpack.c.h.bf16 %v523
    %v560 = vunpack.c.l.bf16 %v524
    %v561 = vunpack.c.h.bf16 %v524
    %v562 = vunpack.c.l.bf16 %v525
    %v563 = vunpack.c.h.bf16 %v525
    %v564 = vunpack.c.l.bf16 %v526
    %v565 = vunpack.c.h.bf16 %v526
    %v566 = vunpack.c.l.bf16 %v527
    %v567 = vunpack.c.h.bf16 %v527
    %v568 = vunpack.c.l.bf16 %v528
    %v569 = vunpack.c.h.bf16 %v528
    %v570 = vunpack.c.l.bf16 %v529
    %v571 = vunpack.c.h.bf16 %v529
    %v572 = vunpack.c.l.bf16 %v530
    %v573 = vunpack.c.h.bf16 %v530
    %v574 = vunpack.c.l.bf16 %v531
    %v575 = vunpack.c.h.bf16 %v531
    %v576 = vunpack.c.l.bf16 %v532
    %v577 = vunpack.c.h.bf16 %v532
    %v578 = vunpack.c.l.bf16 %v533
    %v579 = vunpack.c.h.bf16 %v533
    %v580 = vunpack.c.l.bf16 %v534
    %v581 = vunpack.c.h.bf16 %v534
    %v582 = vunpack.c.l.bf16 %v535
    %v583 = vunpack.c.h.bf16 %v535
    %v584 = vunpack.c.l.bf16 %v536
    %v585 = vunpack.c.h.bf16 %v536
    %v586 = vunpack.c.l.bf16 %v537
    %v587 = vunpack.c.h.bf16 %v537
    %v588 = vunpack.c.l.bf16 %v538
    %v589 = vunpack.c.h.bf16 %v538
    %v590 = vunpack.c.l.bf16 %v539
    %v591 = vunpack.c.h.bf16 %v539
    %v592 = vunpack.c.l.bf16 %v540
    %v593 = vunpack.c.h.bf16 %v540
    %v594 = vunpack.c.l.bf16 %v541
    %v595 = vunpack.c.h.bf16 %v541
    %v596 = vunpack.c.l.bf16 %v542
    %v597 = vunpack.c.h.bf16 %v542
    %v598 = vunpack.c.l.bf16 %v543
    %v599 = vunpack.c.h.bf16 %v543
    %v600 = vunpack.c.l.bf16 %v544
    %v601 = vunpack.c.h.bf16 %v544
    %v602 = vunpack.c.l.bf16 %v545
    %v603 = vunpack.c.h.bf16 %v545
    %v604 = vunpack.c.l.bf16 %v546
    %v605 = vunpack.c.h.bf16 %v546
    %v606 = vunpack.c.l.bf16 %v547
    %v607 = vunpack.c.h.bf16 %v547
    %v608 = vunpack.c.l.bf16 %v548
    %v609 = vunpack.c.h.bf16 %v548
    %v610 = vunpack.c.l.bf16 %v549
    %v611 = vunpack.c.h.bf16 %v549
    %v612 = vunpack.c.l.bf16 %v550
    %v613 = vunpack.c.h.bf16 %v550
    %v614 = vunpack.c.l.bf16 %v551
    %v615 = vunpack.c.h.bf16 %v551
    %v616 = vld [vmem:[#allocation9 + $0x14] sm:$0xff]
    %v617 = vld [vmem:[#allocation9 + $0x1c] sm:$0xff]
    %v618 = vld [vmem:[#allocation9 + $0x24] sm:$0xf]
    %v619 = vld [vmem:[#allocation9 + $0x3c] sm:$0xff]
    %v620 = vld [vmem:[#allocation9 + $0x44] sm:$0xff]
    %v621 = vld [vmem:[#allocation9 + $0x4c] sm:$0xf]
    %v622 = vld [vmem:[#allocation9 + $0x64] sm:$0xff]
    %v623 = vld [vmem:[#allocation9 + $0x6c] sm:$0xff]
    %v624 = vld [vmem:[#allocation9 + $0x74] sm:$0xf]
    %v625 = vld [vmem:[#allocation9 + $0x8c] sm:$0xff]
    %v626 = vld [vmem:[#allocation9 + $0x94] sm:$0xff]
    %v627 = vld [vmem:[#allocation9 + $0x9c] sm:$0xf]
    %v628 = vld [vmem:[#allocation9 + $0xb4] sm:$0xff]
    %v629 = vld [vmem:[#allocation9 + $0xbc] sm:$0xff]
    %v630 = vld [vmem:[#allocation9 + $0xc4] sm:$0xf]
    %v631 = vld [vmem:[#allocation9 + $0xdc] sm:$0xff]
    %v632 = vld [vmem:[#allocation9 + $0xe4] sm:$0xff]
    %v633 = vld [vmem:[#allocation9 + $0xec] sm:$0xf]
    %v634 = vld [vmem:[#allocation9 + $0x104] sm:$0xff]
    %v635 = vld [vmem:[#allocation9 + $0x10c] sm:$0xff]
    %v636 = vld [vmem:[#allocation9 + $0x114] sm:$0xf]
    %v637 = vld [vmem:[#allocation9 + $0x12c] sm:$0xff]
    %v638 = vld [vmem:[#allocation9 + $0x134] sm:$0xff]
    %v639 = vld [vmem:[#allocation9 + $0x13c] sm:$0xf]
    %v640 = vld [vmem:[#allocation9 + $0x154] sm:$0xff]
    %v641 = vld [vmem:[#allocation9 + $0x15c] sm:$0xff]
    %v642 = vld [vmem:[#allocation9 + $0x164] sm:$0xf]
    %v643 = vld [vmem:[#allocation9 + $0x17c] sm:$0xff]
    %v644 = vld [vmem:[#allocation9 + $0x184] sm:$0xff]
    %v645 = vld [vmem:[#allocation9 + $0x18c] sm:$0xf]
    %v646 = vld [vmem:[#allocation9 + $0x1a4] sm:$0xff]
    %v647 = vld [vmem:[#allocation9 + $0x1ac] sm:$0xff]
    %v648 = vld [vmem:[#allocation9 + $0x1b4] sm:$0xf]
    %v649 = vld [vmem:[#allocation9 + $0x1cc] sm:$0xff]
    %v650 = vld [vmem:[#allocation9 + $0x1d4] sm:$0xff]
    %v651 = vld [vmem:[#allocation9 + $0x1dc] sm:$0xf]
    %v652 = vld [vmem:[#allocation9 + $0x1f4] sm:$0xff]
    %v653 = vld [vmem:[#allocation9 + $0x1fc] sm:$0xff]
    %v654 = vld [vmem:[#allocation9 + $0x204] sm:$0xf]
    %v655 = vld [vmem:[#allocation9 + $0x21c] sm:$0xff]
    %v656 = vld [vmem:[#allocation9 + $0x224] sm:$0xff]
    %v657 = vld [vmem:[#allocation9 + $0x22c] sm:$0xf]
    %v658 = vld [vmem:[#allocation9 + $0x244] sm:$0xff]
    %v659 = vld [vmem:[#allocation9 + $0x24c] sm:$0xff]
    %v660 = vld [vmem:[#allocation9 + $0x254] sm:$0xf]
    %v661 = vld [vmem:[#allocation9 + $0x26c] sm:$0xff]
    %v662 = vld [vmem:[#allocation9 + $0x274] sm:$0xff]
    %v663 = vld [vmem:[#allocation9 + $0x27c] sm:$0xf]
    %v664 = vld [vmem:[#allocation9 + $0x294] sm:$0xff]
    %v665 = vld [vmem:[#allocation9 + $0x29c] sm:$0xff]
    %v666 = vld [vmem:[#allocation9 + $0x2a4] sm:$0xf]
    %v667 = vld [vmem:[#allocation9 + $0x2bc] sm:$0xff]
    %v668 = vld [vmem:[#allocation9 + $0x2c4] sm:$0xff]
    %v669 = vld [vmem:[#allocation9 + $0x2cc] sm:$0xf]
    %v670 = vld [vmem:[#allocation9 + $0x2e4] sm:$0xff]
    %v671 = vld [vmem:[#allocation9 + $0x2ec] sm:$0xff]
    %v672 = vld [vmem:[#allocation9 + $0x2f4] sm:$0xf]
    %v673 = vld [vmem:[#allocation9 + $0x30c] sm:$0xff]
    %v674 = vld [vmem:[#allocation9 + $0x314] sm:$0xff]
    %v675 = vld [vmem:[#allocation9 + $0x31c] sm:$0xf]
    %v676 = vld [vmem:[#allocation9 + $0x334] sm:$0xff]
    %v677 = vld [vmem:[#allocation9 + $0x33c] sm:$0xff]
    %v678 = vld [vmem:[#allocation9 + $0x344] sm:$0xf]
    %v679 = vld [vmem:[#allocation9 + $0x35c] sm:$0xff]
    %v680 = vld [vmem:[#allocation9 + $0x364] sm:$0xff]
    %v681 = vld [vmem:[#allocation9 + $0x36c] sm:$0xf]
    %v682 = vld [vmem:[#allocation9 + $0x384] sm:$0xff]
    %v683 = vld [vmem:[#allocation9 + $0x38c] sm:$0xff]
    %v684 = vld [vmem:[#allocation9 + $0x394] sm:$0xf]
    %v685 = vld [vmem:[#allocation9 + $0x3ac] sm:$0xff]
    %v686 = vld [vmem:[#allocation9 + $0x3b4] sm:$0xff]
    %v687 = vld [vmem:[#allocation9 + $0x3bc] sm:$0xf]
    %v688 = vld [vmem:[#allocation9 + $0x3d4] sm:$0xff]
    %v689 = vld [vmem:[#allocation9 + $0x3dc] sm:$0xff]
    %v690 = vld [vmem:[#allocation9 + $0x3e4] sm:$0xf]
    %v691 = vld [vmem:[#allocation9 + $0x3fc] sm:$0xff]
    %v692 = vld [vmem:[#allocation9 + $0x404] sm:$0xff]
    %v693 = vld [vmem:[#allocation9 + $0x40c] sm:$0xf]
    %v694 = vld [vmem:[#allocation9 + $0x424] sm:$0xff]
    %v695 = vld [vmem:[#allocation9 + $0x42c] sm:$0xff]
    %v696 = vld [vmem:[#allocation9 + $0x434] sm:$0xf]
    %v697 = vld [vmem:[#allocation9 + $0x44c] sm:$0xff]
    %v698 = vld [vmem:[#allocation9 + $0x454] sm:$0xff]
    %v699 = vld [vmem:[#allocation9 + $0x45c] sm:$0xf]
    %v700 = vld [vmem:[#allocation9 + $0x474] sm:$0xff]
    %v701 = vld [vmem:[#allocation9 + $0x47c] sm:$0xff]
    %v702 = vld [vmem:[#allocation9 + $0x484] sm:$0xf]
    %v703 = vld [vmem:[#allocation9 + $0x49c] sm:$0xff]
    %v704 = vld [vmem:[#allocation9 + $0x4a4] sm:$0xff]
    %v705 = vld [vmem:[#allocation9 + $0x4ac] sm:$0xf]
    %v706 = vld [vmem:[#allocation9 + $0x4c4] sm:$0xff]
    %v707 = vld [vmem:[#allocation9 + $0x4cc] sm:$0xff]
    %v708 = vld [vmem:[#allocation9 + $0x4d4] sm:$0xf]
    %v709 = vld [vmem:[#allocation9 + $0x4ec] sm:$0xff]
    %v710 = vld [vmem:[#allocation9 + $0x4f4] sm:$0xff]
    %v711 = vld [vmem:[#allocation9 + $0x4fc] sm:$0xf]
    %v712 = vunpack.c.l.bf16 %v616
    %v713 = vunpack.c.h.bf16 %v616
    %v714 = vunpack.c.l.bf16 %v617
    %v715 = vunpack.c.h.bf16 %v617
    %v716 = vunpack.c.l.bf16 %v618
    %v717 = vunpack.c.l.bf16 %v619
    %v718 = vunpack.c.h.bf16 %v619
    %v719 = vunpack.c.l.bf16 %v620
    %v720 = vunpack.c.h.bf16 %v620
    %v721 = vunpack.c.l.bf16 %v621
    %v722 = vunpack.c.l.bf16 %v622
    %v723 = vunpack.c.h.bf16 %v622
    %v724 = vunpack.c.l.bf16 %v623
    %v725 = vunpack.c.h.bf16 %v623
    %v726 = vunpack.c.l.bf16 %v624
    %v727 = vunpack.c.l.bf16 %v625
    %v728 = vunpack.c.h.bf16 %v625
    %v729 = vunpack.c.l.bf16 %v626
    %v730 = vunpack.c.h.bf16 %v626
    %v731 = vunpack.c.l.bf16 %v627
    %v732 = vunpack.c.l.bf16 %v628
    %v733 = vunpack.c.h.bf16 %v628
    %v734 = vunpack.c.l.bf16 %v629
    %v735 = vunpack.c.h.bf16 %v629
    %v736 = vunpack.c.l.bf16 %v630
    %v737 = vunpack.c.l.bf16 %v631
    %v738 = vunpack.c.h.bf16 %v631
    %v739 = vunpack.c.l.bf16 %v632
    %v740 = vunpack.c.h.bf16 %v632
    %v741 = vunpack.c.l.bf16 %v633
    %v742 = vunpack.c.l.bf16 %v634
    %v743 = vunpack.c.h.bf16 %v634
    %v744 = vunpack.c.l.bf16 %v635
    %v745 = vunpack.c.h.bf16 %v635
    %v746 = vunpack.c.l.bf16 %v636
    %v747 = vunpack.c.l.bf16 %v637
    %v748 = vunpack.c.h.bf16 %v637
    %v749 = vunpack.c.l.bf16 %v638
    %v750 = vunpack.c.h.bf16 %v638
    %v751 = vunpack.c.l.bf16 %v639
    %v752 = vunpack.c.l.bf16 %v640
    %v753 = vunpack.c.h.bf16 %v640
    %v754 = vunpack.c.l.bf16 %v641
    %v755 = vunpack.c.h.bf16 %v641
    %v756 = vunpack.c.l.bf16 %v642
    %v757 = vunpack.c.l.bf16 %v643
    %v758 = vunpack.c.h.bf16 %v643
    %v759 = vunpack.c.l.bf16 %v644
    %v760 = vunpack.c.h.bf16 %v644
    %v761 = vunpack.c.l.bf16 %v645
    %v762 = vunpack.c.l.bf16 %v646
    %v763 = vunpack.c.h.bf16 %v646
    %v764 = vunpack.c.l.bf16 %v647
    %v765 = vunpack.c.h.bf16 %v647
    %v766 = vunpack.c.l.bf16 %v648
    %v767 = vunpack.c.l.bf16 %v649
    %v768 = vunpack.c.h.bf16 %v649
    %v769 = vunpack.c.l.bf16 %v650
    %v770 = vunpack.c.h.bf16 %v650
    %v771 = vunpack.c.l.bf16 %v651
    %v772 = vunpack.c.l.bf16 %v652
    %v773 = vunpack.c.h.bf16 %v652
    %v774 = vunpack.c.l.bf16 %v653
    %v775 = vunpack.c.h.bf16 %v653
    %v776 = vunpack.c.l.bf16 %v654
    %v777 = vunpack.c.l.bf16 %v655
    %v778 = vunpack.c.h.bf16 %v655
    %v779 = vunpack.c.l.bf16 %v656
    %v780 = vunpack.c.h.bf16 %v656
    %v781 = vunpack.c.l.bf16 %v657
    %v782 = vunpack.c.l.bf16 %v658
    %v783 = vunpack.c.h.bf16 %v658
    %v784 = vunpack.c.l.bf16 %v659
    %v785 = vunpack.c.h.bf16 %v659
    %v786 = vunpack.c.l.bf16 %v660
    %v787 = vunpack.c.l.bf16 %v661
    %v788 = vunpack.c.h.bf16 %v661
    %v789 = vunpack.c.l.bf16 %v662
    %v790 = vunpack.c.h.bf16 %v662
    %v791 = vunpack.c.l.bf16 %v663
    %v792 = vunpack.c.l.bf16 %v664
    %v793 = vunpack.c.h.bf16 %v664
    %v794 = vunpack.c.l.bf16 %v665
    %v795 = vunpack.c.h.bf16 %v665
    %v796 = vunpack.c.l.bf16 %v666
    %v797 = vunpack.c.l.bf16 %v667
    %v798 = vunpack.c.h.bf16 %v667
    %v799 = vunpack.c.l.bf16 %v668
    %v800 = vunpack.c.h.bf16 %v668
    %v801 = vunpack.c.l.bf16 %v669
    %v802 = vunpack.c.l.bf16 %v670
    %v803 = vunpack.c.h.bf16 %v670
    %v804 = vunpack.c.l.bf16 %v671
    %v805 = vunpack.c.h.bf16 %v671
    %v806 = vunpack.c.l.bf16 %v672
    %v807 = vunpack.c.l.bf16 %v673
    %v808 = vunpack.c.h.bf16 %v673
    %v809 = vunpack.c.l.bf16 %v674
    %v810 = vunpack.c.h.bf16 %v674
    %v811 = vunpack.c.l.bf16 %v675
    %v812 = vunpack.c.l.bf16 %v676
    %v813 = vunpack.c.h.bf16 %v676
    %v814 = vunpack.c.l.bf16 %v677
    %v815 = vunpack.c.h.bf16 %v677
    %v816 = vunpack.c.l.bf16 %v678
    %v817 = vunpack.c.l.bf16 %v679
    %v818 = vunpack.c.h.bf16 %v679
    %v819 = vunpack.c.l.bf16 %v680
    %v820 = vunpack.c.h.bf16 %v680
    %v821 = vunpack.c.l.bf16 %v681
    %v822 = vunpack.c.l.bf16 %v682
    %v823 = vunpack.c.h.bf16 %v682
    %v824 = vunpack.c.l.bf16 %v683
    %v825 = vunpack.c.h.bf16 %v683
    %v826 = vunpack.c.l.bf16 %v684
    %v827 = vunpack.c.l.bf16 %v685
    %v828 = vunpack.c.h.bf16 %v685
    %v829 = vunpack.c.l.bf16 %v686
    %v830 = vunpack.c.h.bf16 %v686
    %v831 = vunpack.c.l.bf16 %v687
    %v832 = vunpack.c.l.bf16 %v688
    %v833 = vunpack.c.h.bf16 %v688
    %v834 = vunpack.c.l.bf16 %v689
    %v835 = vunpack.c.h.bf16 %v689
    %v836 = vunpack.c.l.bf16 %v690
    %v837 = vunpack.c.l.bf16 %v691
    %v838 = vunpack.c.h.bf16 %v691
    %v839 = vunpack.c.l.bf16 %v692
    %v840 = vunpack.c.h.bf16 %v692
    %v841 = vunpack.c.l.bf16 %v693
    %v842 = vunpack.c.l.bf16 %v694
    %v843 = vunpack.c.h.bf16 %v694
    %v844 = vunpack.c.l.bf16 %v695
    %v845 = vunpack.c.h.bf16 %v695
    %v846 = vunpack.c.l.bf16 %v696
    %v847 = vunpack.c.l.bf16 %v697
    %v848 = vunpack.c.h.bf16 %v697
    %v849 = vunpack.c.l.bf16 %v698
    %v850 = vunpack.c.h.bf16 %v698
    %v851 = vunpack.c.l.bf16 %v699
    %v852 = vunpack.c.l.bf16 %v700
    %v853 = vunpack.c.h.bf16 %v700
    %v854 = vunpack.c.l.bf16 %v701
    %v855 = vunpack.c.h.bf16 %v701
    %v856 = vunpack.c.l.bf16 %v702
    %v857 = vunpack.c.l.bf16 %v703
    %v858 = vunpack.c.h.bf16 %v703
    %v859 = vunpack.c.l.bf16 %v704
    %v860 = vunpack.c.h.bf16 %v704
    %v861 = vunpack.c.l.bf16 %v705
    %v862 = vunpack.c.l.bf16 %v706
    %v863 = vunpack.c.h.bf16 %v706
    %v864 = vunpack.c.l.bf16 %v707
    %v865 = vunpack.c.h.bf16 %v707
    %v866 = vunpack.c.l.bf16 %v708
    %v867 = vunpack.c.l.bf16 %v709
    %v868 = vunpack.c.h.bf16 %v709
    %v869 = vunpack.c.l.bf16 %v710
    %v870 = vunpack.c.h.bf16 %v710
    %v871 = vunpack.c.l.bf16 %v711
    %v872 = vld [vmem:[#allocation11] ss:$8 sm:$0x3]
    %s873 = scalar_lea.vmem [#allocation11], 1
    %v874 = vld [vmem:[%s873] ss:$8 sm:$0x3]
    %v875 = vld [vmem:[#allocation11 + $0x2] ss:$0 sm:$0xff]
    %s876 = scalar_lea.vmem [#allocation11], 3
    %v877 = vld [vmem:[%s876] ss:$8 sm:$0x3]
    %s878 = scalar_lea.vmem [#allocation11], 4
    %v879 = vld [vmem:[%s878] ss:$8 sm:$0x3]
    %s880 = scalar_lea.vmem [#allocation11], 5
    %v881 = vld [vmem:[%s880] ss:$8 sm:$0xf]
    %v882 = vld [vmem:[%s880] ss:$8 sm:$0x10]
    %v883 = vor.u32 %v881, %v882
    %s884 = scalar_lea.vmem [#allocation11], 6
    %v885 = vld [vmem:[%s884] ss:$8 sm:$0x3]
    %s886 = scalar_lea.vmem [#allocation11], 7
    %v887 = vld [vmem:[%s886] ss:$8 sm:$0x3]
    %s888 = scalar_lea.vmem [#allocation11], 40
    %v889 = vld [vmem:[%s888] ss:$8 sm:$0x3]
    %s890 = scalar_lea.vmem [#allocation11], 41
    %v891 = vld [vmem:[%s890] ss:$8 sm:$0x3]
    %s892 = scalar_lea.vmem [#allocation11], 42
    %v893 = vld [vmem:[%s892] ss:$8 sm:$0x3]
    %s894 = scalar_lea.vmem [#allocation11], 43
    %v895 = vld [vmem:[%s894] ss:$8 sm:$0x3]
    %s896 = scalar_lea.vmem [#allocation11], 44
    %v897 = vld [vmem:[%s896] ss:$8 sm:$0x3]
    %s898 = scalar_lea.vmem [#allocation11], 45
    %v899 = vld [vmem:[%s898] ss:$8 sm:$0x3]
    %v901 = vlaneseq
    %v902 = vshrl.u32 %v901, 7
    %v903 = vsub.s32 0, %v902
    %v904 = vrot.slane %v872, %v903
    %v905 = vlaneseq
    %v906 = vshrl.u32 %v905, 7
    %v907 = vsub.s32 1, %v906
    %v908 = vrot.slane %v872, %v907
    %911 = vmatprep.subr.mxu0 %v177
    %912 = vmatpush1.msra.mxu0 %v176
    %913 = vmatprep.subr.mxu0 %v179
    %914 = vmatpush1.msra.mxu0 %v178
    %915 = vmatprep.subr.mxu0 %v181
    %916 = vmatpush1.msra.mxu0 %v180
    %917 = vmatprep.subr.mxu0 %v183
    %918 = vmatpush1.msra.mxu0 %v182
    %919 = vmatprep.subr.mxu0 %v185
    %920 = vmatpush1.msra.mxu0 %v184
    %921 = vmatprep.subr.mxu0 %v187
    %922 = vmatpush1.msra.mxu0 %v186
    %923 = vmatprep.subr.mxu0 %v189
    %924 = vmatpush1.msra.mxu0 %v188
    %925 = vmatprep.subr.mxu0 %v191
    %926 = vmatpush1.msra.mxu0 %v190
    %927 = vmatprep.subr.mxu0 %v193
    %928 = vmatpush1.msra.mxu0 %v192
    %929 = vmatprep.subr.mxu0 %v195
    %930 = vmatpush1.msra.mxu0 %v194
    %931 = vmatprep.subr.mxu0 %v197
    %932 = vmatpush1.msra.mxu0 %v196
    %933 = vmatprep.subr.mxu0 %v199
    %934 = vmatpush1.msra.mxu0 %v198
    %935 = vmatprep.subr.mxu0 %v201
    %936 = vmatpush1.msra.mxu0 %v200
    %937 = vmatprep.subr.mxu0 %v203
    %938 = vmatpush1.msra.mxu0 %v202
    %939 = vmatprep.subr.mxu0 %v205
    %940 = vmatpush1.msra.mxu0 %v204
    %941 = vmatprep.subr.mxu0 %v207
    %942 = vmatpush1.msra.mxu0 %v206
    %943 = vmatprep.subr.mxu0 %v209
    %944 = vmatpush1.msra.mxu0 %v208
    %945 = vmatprep.subr.mxu0 %v211
    %946 = vmatpush1.msra.mxu0 %v210
    %947 = vmatprep.subr.mxu0 %v213
    %948 = vmatpush1.msra.mxu0 %v212
    %949 = vmatprep.subr.mxu0 %v215
    %950 = vmatpush1.msra.mxu0 %v214
    %951 = vmatprep.subr.mxu0 %v217
    %952 = vmatpush1.msra.mxu0 %v216
    %953 = vmatprep.subr.mxu0 %v219
    %954 = vmatpush1.msra.mxu0 %v218
    %955 = vmatprep.subr.mxu0 %v221
    %956 = vmatpush1.msra.mxu0 %v220
    %957 = vmatprep.subr.mxu0 %v223
    %958 = vmatpush1.msra.mxu0 %v222
    %959 = vmatprep.subr.mxu0 %v225
    %960 = vmatpush1.msra.mxu0 %v224
    %961 = vmatprep.subr.mxu0 %v227
    %962 = vmatpush1.msra.mxu0 %v226
    %963 = vmatprep.subr.mxu0 %v229
    %964 = vmatpush1.msra.mxu0 %v228
    %965 = vmatprep.subr.mxu0 %v231
    %966 = vmatpush1.msra.mxu0 %v230
    %967 = vmatprep.subr.mxu0 %v233
    %968 = vmatpush1.msra.mxu0 %v232
    %969 = vmatprep.subr.mxu0 %v235
    %970 = vmatpush1.msra.mxu0 %v234
    %971 = vmatprep.subr.mxu0 %v237
    %972 = vmatpush1.msra.mxu0 %v236
    %973 = vmatprep.subr.mxu0 %v239
    %974 = vmatpush1.msra.mxu0 %v238
    %975 = vmatprep.mubr.f32.mxu0 %v91
    %976 = vmatmul.mubr.f32.gmra.mrb[0].mxu0 %v90
    %v977 = vpop.f32.mrb[0].mxu0
    %v978 = vadd.f32 %v904, %v977
    %v979 = vpop.f32.mrb[0].mxu0
    %v980 = vadd.f32 %v908, %v979
    %981 = vdwg.mxu0
    %982 = vmatprep.subr.mxu0 %v241
    %983 = vmatpush1.msra.mxu0 %v240
    %984 = vmatprep.subr.mxu0 %v243
    %985 = vmatpush1.msra.mxu0 %v242
    %986 = vmatprep.subr.mxu0 %v245
    %987 = vmatpush1.msra.mxu0 %v244
    %988 = vmatprep.subr.mxu0 %v247
    %989 = vmatpush1.msra.mxu0 %v246
    %990 = vmatprep.subr.mxu0 %v249
    %991 = vmatpush1.msra.mxu0 %v248
    %992 = vmatprep.subr.mxu0 %v251
    %993 = vmatpush1.msra.mxu0 %v250
    %994 = vmatprep.subr.mxu0 %v253
    %995 = vmatpush1.msra.mxu0 %v252
    %996 = vmatprep.subr.mxu0 %v255
    %997 = vmatpush1.msra.mxu0 %v254
    %998 = vmatprep.subr.mxu0 %v257
    %999 = vmatpush1.msra.mxu0 %v256
    %1000 = vmatprep.subr.mxu0 %v259
    %1001 = vmatpush1.msra.mxu0 %v258
    %1002 = vmatprep.subr.mxu0 %v261
    %1003 = vmatpush1.msra.mxu0 %v260
    %1004 = vmatprep.subr.mxu0 %v263
    %1005 = vmatpush1.msra.mxu0 %v262
    %1006 = vmatprep.subr.mxu0 %v265
    %1007 = vmatpush1.msra.mxu0 %v264
    %1008 = vmatprep.subr.mxu0 %v267
    %1009 = vmatpush1.msra.mxu0 %v266
    %1010 = vmatprep.subr.mxu0 %v269
    %1011 = vmatpush1.msra.mxu0 %v268
    %1012 = vmatprep.subr.mxu0 %v271
    %1013 = vmatpush1.msra.mxu0 %v270
    %1014 = vmatprep.subr.mxu0 %v273
    %1015 = vmatpush1.msra.mxu0 %v272
    %1016 = vmatprep.subr.mxu0 %v275
    %1017 = vmatpush1.msra.mxu0 %v274
    %1018 = vmatprep.subr.mxu0 %v277
    %1019 = vmatpush1.msra.mxu0 %v276
    %1020 = vmatprep.subr.mxu0 %v279
    %1021 = vmatpush1.msra.mxu0 %v278
    %1022 = vmatprep.subr.mxu0 %v281
    %1023 = vmatpush1.msra.mxu0 %v280
    %1024 = vmatprep.subr.mxu0 %v283
    %1025 = vmatpush1.msra.mxu0 %v282
    %1026 = vmatprep.subr.mxu0 %v285
    %1027 = vmatpush1.msra.mxu0 %v284
    %1028 = vmatprep.subr.mxu0 %v287
    %1029 = vmatpush1.msra.mxu0 %v286
    %1030 = vmatprep.subr.mxu0 %v289
    %1031 = vmatpush1.msra.mxu0 %v288
    %1032 = vmatprep.subr.mxu0 %v291
    %1033 = vmatpush1.msra.mxu0 %v290
    %1034 = vmatprep.subr.mxu0 %v293
    %1035 = vmatpush1.msra.mxu0 %v292
    %1036 = vmatprep.subr.mxu0 %v295
    %1037 = vmatpush1.msra.mxu0 %v294
    %1038 = vmatprep.subr.mxu0 %v297
    %1039 = vmatpush1.msra.mxu0 %v296
    %1040 = vmatprep.subr.mxu0 %v299
    %1041 = vmatpush1.msra.mxu0 %v298
    %1042 = vmatprep.subr.mxu0 %v301
    %1043 = vmatpush1.msra.mxu0 %v300
    %1044 = vmatprep.subr.mxu0 %v303
    %1045 = vmatpush1.msra.mxu0 %v302
    %1046 = vmatprep.mubr.f32.mxu0 %v93
    %1047 = vmatmul.mubr.f32.gmra.mrb[0].mxu0 %v92
    %v1048 = vpop.f32.mrb[0].mxu0
    %v1049 = vadd.f32 %v978, %v1048
    %v1050 = vpop.f32.mrb[0].mxu0
    %v1051 = vadd.f32 %v980, %v1050
    %1052 = vdwg.mxu0
    %1053 = vmatprep.subr.mxu0 %v305
    %1054 = vmatpush1.msra.mxu0 %v304
    %1055 = vmatprep.subr.mxu0 %v307
    %1056 = vmatpush1.msra.mxu0 %v306
    %1057 = vmatprep.subr.mxu0 %v309
    %1058 = vmatpush1.msra.mxu0 %v308
    %1059 = vmatprep.subr.mxu0 %v311
    %1060 = vmatpush1.msra.mxu0 %v310
    %1061 = vmatprep.subr.mxu0 %v313
    %1062 = vmatpush1.msra.mxu0 %v312
    %1063 = vmatprep.subr.mxu0 %v315
    %1064 = vmatpush1.msra.mxu0 %v314
    %1065 = vmatprep.subr.mxu0 %v317
    %1066 = vmatpush1.msra.mxu0 %v316
    %1067 = vmatprep.subr.mxu0 %v319
    %1068 = vmatpush1.msra.mxu0 %v318
    %1069 = vmatprep.subr.mxu0 %v321
    %1070 = vmatpush1.msra.mxu0 %v320
    %1071 = vmatprep.subr.mxu0 %v323
    %1072 = vmatpush1.msra.mxu0 %v322
    %1073 = vmatprep.subr.mxu0 %v325
    %1074 = vmatpush1.msra.mxu0 %v324
    %1075 = vmatprep.subr.mxu0 %v327
    %1076 = vmatpush1.msra.mxu0 %v326
    %1077 = vmatprep.subr.mxu0 %v329
    %1078 = vmatpush1.msra.mxu0 %v328
    %1079 = vmatprep.subr.mxu0 %v331
    %1080 = vmatpush1.msra.mxu0 %v330
    %1081 = vmatprep.subr.mxu0 %v333
    %1082 = vmatpush1.msra.mxu0 %v332
    %1083 = vmatprep.subr.mxu0 %v335
    %1084 = vmatpush1.msra.mxu0 %v334
    %1085 = vmatprep.subr.mxu0 0.0
    %1086 = vmatpush1.msra.mxu0 0.0
    %1087 = vmatprep.subr.mxu0 0.0
    %1088 = vmatpush1.msra.mxu0 0.0
    %1089 = vmatprep.subr.mxu0 0.0
    %1090 = vmatpush1.msra.mxu0 0.0
    %1091 = vmatprep.subr.mxu0 0.0
    %1092 = vmatpush1.msra.mxu0 0.0
    %1093 = vmatprep.subr.mxu0 0.0
    %1094 = vmatpush1.msra.mxu0 0.0
    %1095 = vmatprep.subr.mxu0 0.0
    %1096 = vmatpush1.msra.mxu0 0.0
    %1097 = vmatprep.subr.mxu0 0.0
    %1098 = vmatpush1.msra.mxu0 0.0
    %1099 = vmatprep.subr.mxu0 0.0
    %1100 = vmatpush1.msra.mxu0 0.0
    %1101 = vmatprep.subr.mxu0 0.0
    %1102 = vmatpush1.msra.mxu0 0.0
    %1103 = vmatprep.subr.mxu0 0.0
    %1104 = vmatpush1.msra.mxu0 0.0
    %1105 = vmatprep.subr.mxu0 0.0
    %1106 = vmatpush1.msra.mxu0 0.0
    %1107 = vmatprep.subr.mxu0 0.0
    %1108 = vmatpush1.msra.mxu0 0.0
    %1109 = vmatprep.subr.mxu0 0.0
    %1110 = vmatpush1.msra.mxu0 0.0
    %1111 = vmatprep.subr.mxu0 0.0
    %1112 = vmatpush1.msra.mxu0 0.0
    %1113 = vmatprep.subr.mxu0 0.0
    %1114 = vmatpush1.msra.mxu0 0.0
    %1115 = vmatprep.subr.mxu0 0.0
    %1116 = vmatpush1.msra.mxu0 0.0
    %1117 = vmatprep.mubr.f32.mxu0 0.0
    %1118 = vmatmul.mubr.f32.gmra.mrb[0].mxu0 %v94
    %v1119 = vpop.f32.mrb[0].mxu0
    %v1120 = vadd.f32 %v1049, %v1119
    %v1121 = vpop.f32.mrb[0].mxu0
    %v1122 = vadd.f32 %v1051, %v1121
    %1123 = vdwg.mxu0
    %v1124 = vmax.f32 %v1120, 0.0
    %v1125 = vmax.f32 %v1122, 0.0
    %v1126 = vrot.slane %v1124, 4
    %v1127 = vadd.f32 %v1124, %v1126
    %v1128 = vrot.slane %v1127, 2
    %v1129 = vadd.f32 %v1127, %v1128
    %v1130 = vrot.slane %v1129, 1
    %v1131 = vadd.f32 %v1129, %v1130
    %v1132 = vrot.slane %v1125, 4
    %v1133 = vadd.f32 %v1125, %v1132
    %v1134 = vrot.slane %v1133, 2
    %v1135 = vadd.f32 %v1133, %v1134
    %v1136 = vrot.slane %v1135, 1
    %v1137 = vadd.f32 %v1135, %v1136
    %v1138 = vrcp.pop 8.0
    %v1139 = vmul.f32 %v1131, %v1138
    %v1140 = vmul.f32 %v1137, %v1138
    %v1141 = vmul.f32 %v1124, %v1124
    %v1142 = vmul.f32 %v1125, %v1125
    %v1143 = vrot.slane %v1141, 4
    %v1144 = vadd.f32 %v1141, %v1143
    %v1145 = vrot.slane %v1144, 2
    %v1146 = vadd.f32 %v1144, %v1145
    %v1147 = vrot.slane %v1146, 1
    %v1148 = vadd.f32 %v1146, %v1147
    %v1149 = vrot.slane %v1142, 4
    %v1150 = vadd.f32 %v1142, %v1149
    %v1151 = vrot.slane %v1150, 2
    %v1152 = vadd.f32 %v1150, %v1151
    %v1153 = vrot.slane %v1152, 1
    %v1154 = vadd.f32 %v1152, %v1153
    %v1155 = vmul.f32 %v1148, %v1138
    %v1156 = vmul.f32 %v1154, %v1138
    %v1157 = vmul.f32 %v1139, %v1139
    %v1158 = vmul.f32 %v1140, %v1140
    %v1159 = vsub.f32 %v1155, %v1157
    %v1160 = vsub.f32 %v1156, %v1158
    %v1161 = vsub.f32 %v1124, %v1139
    %v1162 = vsub.f32 %v1125, %v1140
    %v1163 = vadd.f32 %v1159, 1e-05
    %v1164 = vadd.f32 %v1160, 1e-05
    %v1165 = vrsqrt.pop %v1163
    %v1166 = vrsqrt.pop %v1164
    %v1167 = vmul.f32 %v1161, %v1165
    %v1168 = vmul.f32 %v1162, %v1166
    %v1170 = vlaneseq
    %v1171 = vshrl.u32 %v1170, 7
    %v1172 = vsub.s32 0, %v1171
    %v1173 = vrot.slane %v885, %v1172
    %v1174 = vlaneseq
    %v1175 = vshrl.u32 %v1174, 7
    %v1176 = vsub.s32 1, %v1175
    %v1177 = vrot.slane %v885, %v1176
    %v1180 = vmul.f32 %v1167, %v1173
    %v1181 = vmul.f32 %v1168, %v1177
    %v1183 = vlaneseq
    %v1184 = vshrl.u32 %v1183, 7
    %v1185 = vsub.s32 0, %v1184
    %v1186 = vrot.slane %v887, %v1185
    %v1187 = vlaneseq
    %v1188 = vshrl.u32 %v1187, 7
    %v1189 = vsub.s32 1, %v1188
    %v1190 = vrot.slane %v887, %v1189
    %v1193 = vadd.f32 %v1180, %v1186
    %v1194 = vadd.f32 %v1181, %v1190
    %v1196 = vlaneseq
    %v1197 = vshrl.u32 %v1196, 7
    %v1198 = vsub.s32 0, %v1197
    %v1199 = vrot.slane %v874, %v1198
    %v1200 = vlaneseq
    %v1201 = vshrl.u32 %v1200, 7
    %v1202 = vsub.s32 1, %v1201
    %v1203 = vrot.slane %v874, %v1202
    %1206 = vmatprep.subr.mxu0 %v393
    %1207 = vmatpush1.msra.mxu0 %v392
    %1208 = vmatprep.subr.mxu0 %v395
    %1209 = vmatpush1.msra.mxu0 %v394
    %1210 = vmatprep.subr.mxu0 %v397
    %1211 = vmatpush1.msra.mxu0 %v396
    %1212 = vmatprep.subr.mxu0 %v399
    %1213 = vmatpush1.msra.mxu0 %v398
    %1214 = vmatprep.subr.mxu0 %v401
    %1215 = vmatpush1.msra.mxu0 %v400
    %1216 = vmatprep.subr.mxu0 %v403
    %1217 = vmatpush1.msra.mxu0 %v402
    %1218 = vmatprep.subr.mxu0 %v405
    %1219 = vmatpush1.msra.mxu0 %v404
    %1220 = vmatprep.subr.mxu0 %v407
    %1221 = vmatpush1.msra.mxu0 %v406
    %1222 = vmatprep.subr.mxu0 %v409
    %1223 = vmatpush1.msra.mxu0 %v408
    %1224 = vmatprep.subr.mxu0 %v411
    %1225 = vmatpush1.msra.mxu0 %v410
    %1226 = vmatprep.subr.mxu0 %v413
    %1227 = vmatpush1.msra.mxu0 %v412
    %1228 = vmatprep.subr.mxu0 %v415
    %1229 = vmatpush1.msra.mxu0 %v414
    %1230 = vmatprep.subr.mxu0 %v417
    %1231 = vmatpush1.msra.mxu0 %v416
    %1232 = vmatprep.subr.mxu0 %v419
    %1233 = vmatpush1.msra.mxu0 %v418
    %1234 = vmatprep.subr.mxu0 %v421
    %1235 = vmatpush1.msra.mxu0 %v420
    %1236 = vmatprep.subr.mxu0 %v423
    %1237 = vmatpush1.msra.mxu0 %v422
    %1238 = vmatprep.subr.mxu0 %v425
    %1239 = vmatpush1.msra.mxu0 %v424
    %1240 = vmatprep.subr.mxu0 %v427
    %1241 = vmatpush1.msra.mxu0 %v426
    %1242 = vmatprep.subr.mxu0 %v429
    %1243 = vmatpush1.msra.mxu0 %v428
    %1244 = vmatprep.subr.mxu0 %v431
    %1245 = vmatpush1.msra.mxu0 %v430
    %1246 = vmatprep.subr.mxu0 %v433
    %1247 = vmatpush1.msra.mxu0 %v432
    %1248 = vmatprep.subr.mxu0 %v435
    %1249 = vmatpush1.msra.mxu0 %v434
    %1250 = vmatprep.subr.mxu0 %v437
    %1251 = vmatpush1.msra.mxu0 %v436
    %1252 = vmatprep.subr.mxu0 %v439
    %1253 = vmatpush1.msra.mxu0 %v438
    %1254 = vmatprep.subr.mxu0 %v441
    %1255 = vmatpush1.msra.mxu0 %v440
    %1256 = vmatprep.subr.mxu0 %v443
    %1257 = vmatpush1.msra.mxu0 %v442
    %1258 = vmatprep.subr.mxu0 %v445
    %1259 = vmatpush1.msra.mxu0 %v444
    %1260 = vmatprep.subr.mxu0 %v447
    %1261 = vmatpush1.msra.mxu0 %v446
    %1262 = vmatprep.subr.mxu0 %v449
    %1263 = vmatpush1.msra.mxu0 %v448
    %1264 = vmatprep.subr.mxu0 %v451
    %1265 = vmatpush1.msra.mxu0 %v450
    %1266 = vmatprep.subr.mxu0 %v453
    %1267 = vmatpush1.msra.mxu0 %v452
    %1268 = vmatprep.subr.mxu0 %v455
    %1269 = vmatpush1.msra.mxu0 %v454
    %1270 = vmatprep.mubr.f32.mxu0 %v1194
    %1271 = vmatmul.mubr.f32.gmra.mrb[0].mxu0 %v1193
    %v1272 = vpop.f32.mrb[0].mxu0
    %v1273 = vadd.f32 %v1199, %v1272
    %v1274 = vpop.f32.mrb[0].mxu0
    %v1275 = vadd.f32 %v1203, %v1274
    %1276 = vdwg.mxu0
    %v1277 = vmax.f32 %v1273, 0.0
    %v1278 = vmax.f32 %v1275, 0.0
    %v1279 = vrot.slane %v1277, 4
    %v1280 = vadd.f32 %v1277, %v1279
    %v1281 = vrot.slane %v1280, 2
    %v1282 = vadd.f32 %v1280, %v1281
    %v1283 = vrot.slane %v1282, 1
    %v1284 = vadd.f32 %v1282, %v1283
    %v1285 = vrot.slane %v1278, 4
    %v1286 = vadd.f32 %v1278, %v1285
    %v1287 = vrot.slane %v1286, 2
    %v1288 = vadd.f32 %v1286, %v1287
    %v1289 = vrot.slane %v1288, 1
    %v1290 = vadd.f32 %v1288, %v1289
    %v1291 = vmul.f32 %v1284, %v1138
    %v1292 = vmul.f32 %v1290, %v1138
    %v1293 = vmul.f32 %v1277, %v1277
    %v1294 = vmul.f32 %v1278, %v1278
    %v1295 = vrot.slane %v1293, 4
    %v1296 = vadd.f32 %v1293, %v1295
    %v1297 = vrot.slane %v1296, 2
    %v1298 = vadd.f32 %v1296, %v1297
    %v1299 = vrot.slane %v1298, 1
    %v1300 = vadd.f32 %v1298, %v1299
    %v1301 = vrot.slane %v1294, 4
    %v1302 = vadd.f32 %v1294, %v1301
    %v1303 = vrot.slane %v1302, 2
    %v1304 = vadd.f32 %v1302, %v1303
    %v1305 = vrot.slane %v1304, 1
    %v1306 = vadd.f32 %v1304, %v1305
    %v1307 = vmul.f32 %v1300, %v1138
    %v1308 = vmul.f32 %v1306, %v1138
    %v1309 = vmul.f32 %v1291, %v1291
    %v1310 = vmul.f32 %v1292, %v1292
    %v1311 = vsub.f32 %v1307, %v1309
    %v1312 = vsub.f32 %v1308, %v1310
    %v1313 = vsub.f32 %v1277, %v1291
    %v1314 = vsub.f32 %v1278, %v1292
    %v1315 = vadd.f32 %v1311, 1e-05
    %v1316 = vadd.f32 %v1312, 1e-05
    %v1317 = vrsqrt.pop %v1315
    %v1318 = vrsqrt.pop %v1316
    %v1319 = vmul.f32 %v1313, %v1317
    %v1320 = vmul.f32 %v1314, %v1318
    %v1322 = vlaneseq
    %v1323 = vshrl.u32 %v1322, 7
    %v1324 = vsub.s32 0, %v1323
    %v1325 = vrot.slane %v889, %v1324
    %v1326 = vlaneseq
    %v1327 = vshrl.u32 %v1326, 7
    %v1328 = vsub.s32 1, %v1327
    %v1329 = vrot.slane %v889, %v1328
    %v1332 = vmul.f32 %v1319, %v1325
    %v1333 = vmul.f32 %v1320, %v1329
    %v1335 = vlaneseq
    %v1336 = vshrl.u32 %v1335, 7
    %v1337 = vsub.s32 0, %v1336
    %v1338 = vrot.slane %v891, %v1337
    %v1339 = vlaneseq
    %v1340 = vshrl.u32 %v1339, 7
    %v1341 = vsub.s32 1, %v1340
    %v1342 = vrot.slane %v891, %v1341
    %v1345 = vadd.f32 %v1332, %v1338
    %v1346 = vadd.f32 %v1333, %v1342
    %1347 = vmatprep.subr.mxu0 0.0
    %1348 = vmatpush1.msra.mxu0 %v488
    %1349 = vmatprep.subr.mxu0 0.0
    %1350 = vmatpush1.msra.mxu0 %v489
    %1351 = vmatprep.subr.mxu0 0.0
    %1352 = vmatpush1.msra.mxu0 %v490
    %1353 = vmatprep.subr.mxu0 0.0
    %1354 = vmatpush1.msra.mxu0 %v491
    %1355 = vmatprep.subr.mxu0 0.0
    %1356 = vmatpush1.msra.mxu0 %v492
    %1357 = vmatprep.subr.mxu0 0.0
    %1358 = vmatpush1.msra.mxu0 %v493
    %1359 = vmatprep.subr.mxu0 0.0
    %1360 = vmatpush1.msra.mxu0 %v494
    %1361 = vmatprep.subr.mxu0 0.0
    %1362 = vmatpush1.msra.mxu0 %v495
    %1363 = vmatprep.subr.mxu0 0.0
    %1364 = vmatpush1.msra.mxu0 %v496
    %1365 = vmatprep.subr.mxu0 0.0
    %1366 = vmatpush1.msra.mxu0 %v497
    %1367 = vmatprep.subr.mxu0 0.0
    %1368 = vmatpush1.msra.mxu0 %v498
    %1369 = vmatprep.subr.mxu0 0.0
    %1370 = vmatpush1.msra.mxu0 %v499
    %1371 = vmatprep.subr.mxu0 0.0
    %1372 = vmatpush1.msra.mxu0 %v500
    %1373 = vmatprep.subr.mxu0 0.0
    %1374 = vmatpush1.msra.mxu0 %v501
    %1375 = vmatprep.subr.mxu0 0.0
    %1376 = vmatpush1.msra.mxu0 %v502
    %1377 = vmatprep.subr.mxu0 0.0
    %1378 = vmatpush1.msra.mxu0 %v503
    %1379 = vmatprep.subr.mxu0 0.0
    %1380 = vmatpush1.msra.mxu0 %v504
    %1381 = vmatprep.subr.mxu0 0.0
    %1382 = vmatpush1.msra.mxu0 %v505
    %1383 = vmatprep.subr.mxu0 0.0
    %1384 = vmatpush1.msra.mxu0 %v506
    %1385 = vmatprep.subr.mxu0 0.0
    %1386 = vmatpush1.msra.mxu0 %v507
    %1387 = vmatprep.subr.mxu0 0.0
    %1388 = vmatpush1.msra.mxu0 %v508
    %1389 = vmatprep.subr.mxu0 0.0
    %1390 = vmatpush1.msra.mxu0 %v509
    %1391 = vmatprep.subr.mxu0 0.0
    %1392 = vmatpush1.msra.mxu0 %v510
    %1393 = vmatprep.subr.mxu0 0.0
    %1394 = vmatpush1.msra.mxu0 %v511
    %1395 = vmatprep.subr.mxu0 0.0
    %1396 = vmatpush1.msra.mxu0 %v512
    %1397 = vmatprep.subr.mxu0 0.0
    %1398 = vmatpush1.msra.mxu0 %v513
    %1399 = vmatprep.subr.mxu0 0.0
    %1400 = vmatpush1.msra.mxu0 %v514
    %1401 = vmatprep.subr.mxu0 0.0
    %1402 = vmatpush1.msra.mxu0 %v515
    %1403 = vmatprep.subr.mxu0 0.0
    %1404 = vmatpush1.msra.mxu0 %v516
    %1405 = vmatprep.subr.mxu0 0.0
    %1406 = vmatpush1.msra.mxu0 %v517
    %1407 = vmatprep.subr.mxu0 0.0
    %1408 = vmatpush1.msra.mxu0 %v518
    %1409 = vmatprep.subr.mxu0 0.0
    %1410 = vmatpush1.msra.mxu0 %v519
    %1411 = vmatprep.mubr.f32.mxu0 %v1346
    %1412 = vmatmul.mubr.f32.gmra.mrb[0].mxu0 %v1345
    %v1413 = vpop.f32.mrb[0].mxu0
    %v1414 = vadd.f32 %v875, %v1413
    %v1415 = vpop.f32.mrb[0].mxu0
    %1416 = vdwg.mxu0
    %v1417 = vmul.f32 %v1414, 0.5
    %v1418 = vmul.f32 %v1417, 1.442695
    %v1419 = vpow.pop %v1418
    %v1420 = vadd.f32 %v1414, 1.0
    %v1421 = vmul.f32 %v1414, %v1414
    %1423 = vrot.lane.b32.xlu0 %v1421, 64
    %v1424 = vpop.permute.xlu0 %1423
    %v1426 = vsub.f32 %v1420, %v1424
    %v1427 = vmul.f32 %v1419, %v1419
    %v1428 = vsub.f32 %v1426, %v1427
    %1430 = vrot.lane.b32.xlu0 %v1428, 64
    %v1431 = vpop.permute.xlu0 %1430
    %vm1433 = vcmask 523264
    %v1434 = vsel %vm1433, %v1431, 0.0
    %1435 = vadd.xlane.f32.xlu0 %v1434
    %v1436 = vpop.xlane.xlu0 %1435
    %v1437 = vrot.slane %v1436, 4
    %v1438 = vadd.f32 %v1436, %v1437
    %v1439 = vrot.slane %v1438, 2
    %v1440 = vadd.f32 %v1438, %v1439
    %v1441 = vrot.slane %v1440, 1
    %v1442 = vadd.f32 %v1440, %v1441
    %s1443 = vtos %v1442
    %s1444 = smul.f32 %s1443, 0.5
    %1446 = vrot.lane.b32.xlu0 %v1419, 64
    %v1447 = vpop.permute.xlu0 %1446
    %v1449 = vmul.f32 %v95, %v1447
    %v1450 = vadd.f32 %v1414, %v1449
    %1451 = vst.msk [vmem:[#allocation13] sm:$0xff] %vm1433, %v1450
    %v1453 = vlaneseq
    %v1454 = vshrl.u32 %v1453, 7
    %v1455 = vsub.s32 0, %v1454
    %v1456 = vrot.slane %v877, %v1455
    %v1457 = vlaneseq
    %v1458 = vshrl.u32 %v1457, 7
    %v1459 = vsub.s32 1, %v1458
    %v1460 = vrot.slane %v877, %v1459
    %v1464 = vsel %vm1433, %v1450, 0
    %1466 = vmatprep.subr.mxu0 %v345
    %1467 = vmatpush1.msra.mxu0 %v344
    %1468 = vmatprep.subr.mxu0 %v347
    %1469 = vmatpush1.msra.mxu0 %v346
    %1470 = vmatprep.subr.mxu0 %v349
    %1471 = vmatpush1.msra.mxu0 %v348
    %1472 = vmatprep.subr.mxu0 %v351
    %1473 = vmatpush1.msra.mxu0 %v350
    %1474 = vmatprep.subr.mxu0 %v353
    %1475 = vmatpush1.msra.mxu0 %v352
    %1476 = vmatprep.subr.mxu0 %v355
    %1477 = vmatpush1.msra.mxu0 %v354
    %1478 = vmatprep.subr.mxu0 %v357
    %1479 = vmatpush1.msra.mxu0 %v356
    %1480 = vmatprep.subr.mxu0 %v359
    %1481 = vmatpush1.msra.mxu0 %v358
    %1482 = vmatprep.subr.mxu0 0.0
    %1483 = vmatpush1.msra.mxu0 0.0
    %1484 = vmatprep.subr.mxu0 0.0
    %1485 = vmatpush1.msra.mxu0 0.0
    %1486 = vmatprep.subr.mxu0 0.0
    %1487 = vmatpush1.msra.mxu0 0.0
    %1488 = vmatprep.subr.mxu0 0.0
    %1489 = vmatpush1.msra.mxu0 0.0
    %1490 = vmatprep.subr.mxu0 0.0
    %1491 = vmatpush1.msra.mxu0 0.0
    %1492 = vmatprep.subr.mxu0 0.0
    %1493 = vmatpush1.msra.mxu0 0.0
    %1494 = vmatprep.subr.mxu0 0.0
    %1495 = vmatpush1.msra.mxu0 0.0
    %1496 = vmatprep.subr.mxu0 0.0
    %1497 = vmatpush1.msra.mxu0 0.0
    %1498 = vmatprep.subr.mxu0 0.0
    %1499 = vmatpush1.msra.mxu0 0.0
    %1500 = vmatprep.subr.mxu0 0.0
    %1501 = vmatpush1.msra.mxu0 0.0
    %1502 = vmatprep.subr.mxu0 0.0
    %1503 = vmatpush1.msra.mxu0 0.0
    %1504 = vmatprep.subr.mxu0 0.0
    %1505 = vmatpush1.msra.mxu0 0.0
    %1506 = vmatprep.subr.mxu0 0.0
    %1507 = vmatpush1.msra.mxu0 0.0
    %1508 = vmatprep.subr.mxu0 0.0
    %1509 = vmatpush1.msra.mxu0 0.0
    %1510 = vmatprep.subr.mxu0 0.0
    %1511 = vmatpush1.msra.mxu0 0.0
    %1512 = vmatprep.subr.mxu0 0.0
    %1513 = vmatpush1.msra.mxu0 0.0
    %1514 = vmatprep.subr.mxu0 0.0
    %1515 = vmatpush1.msra.mxu0 0.0
    %1516 = vmatprep.subr.mxu0 0.0
    %1517 = vmatpush1.msra.mxu0 0.0
    %1518 = vmatprep.subr.mxu0 0.0
    %1519 = vmatpush1.msra.mxu0 0.0
    %1520 = vmatprep.subr.mxu0 0.0
    %1521 = vmatpush1.msra.mxu0 0.0
    %1522 = vmatprep.subr.mxu0 0.0
    %1523 = vmatpush1.msra.mxu0 0.0
    %1524 = vmatprep.subr.mxu0 0.0
    %1525 = vmatpush1.msra.mxu0 0.0
    %1526 = vmatprep.subr.mxu0 0.0
    %1527 = vmatpush1.msra.mxu0 0.0
    %1528 = vmatprep.subr.mxu0 0.0
    %1529 = vmatpush1.msra.mxu0 0.0
    %1530 = vmatprep.mubr.f32.mxu0 0.0
    %1531 = vmatmul.mubr.f32.gmra.mrb[0].mxu0 %v1464
    %v1532 = vpop.f32.mrb[0].mxu0
    %v1533 = vadd.f32 %v1456, %v1532
    %v1534 = vpop.f32.mrb[0].mxu0
    %v1535 = vadd.f32 %v1460, %v1534
    %1536 = vdwg.mxu0
    %v1537 = vmax.f32 %v1533, 0.0
    %v1538 = vmax.f32 %v1535, 0.0
    %v1539 = vrot.slane %v1537, 4
    %v1540 = vadd.f32 %v1537, %v1539
    %v1541 = vrot.slane %v1540, 2
    %v1542 = vadd.f32 %v1540, %v1541
    %v1543 = vrot.slane %v1542, 1
    %v1544 = vadd.f32 %v1542, %v1543
    %v1545 = vrot.slane %v1538, 4
    %v1546 = vadd.f32 %v1538, %v1545
    %v1547 = vrot.slane %v1546, 2
    %v1548 = vadd.f32 %v1546, %v1547
    %v1549 = vrot.slane %v1548, 1
    %v1550 = vadd.f32 %v1548, %v1549
    %v1551 = vmul.f32 %v1544, %v1138
    %v1552 = vmul.f32 %v1550, %v1138
    %v1553 = vmul.f32 %v1537, %v1537
    %v1554 = vmul.f32 %v1538, %v1538
    %v1555 = vrot.slane %v1553, 4
    %v1556 = vadd.f32 %v1553, %v1555
    %v1557 = vrot.slane %v1556, 2
    %v1558 = vadd.f32 %v1556, %v1557
    %v1559 = vrot.slane %v1558, 1
    %v1560 = vadd.f32 %v1558, %v1559
    %v1561 = vrot.slane %v1554, 4
    %v1562 = vadd.f32 %v1554, %v1561
    %v1563 = vrot.slane %v1562, 2
    %v1564 = vadd.f32 %v1562, %v1563
    %v1565 = vrot.slane %v1564, 1
    %v1566 = vadd.f32 %v1564, %v1565
    %v1567 = vmul.f32 %v1560, %v1138
    %v1568 = vmul.f32 %v1566, %v1138
    %v1569 = vmul.f32 %v1551, %v1551
    %v1570 = vmul.f32 %v1552, %v1552
    %v1571 = vsub.f32 %v1567, %v1569
    %v1572 = vsub.f32 %v1568, %v1570
    %v1573 = vsub.f32 %v1537, %v1551
    %v1574 = vsub.f32 %v1538, %v1552
    %v1575 = vadd.f32 %v1571, 1e-05
    %v1576 = vadd.f32 %v1572, 1e-05
    %v1577 = vrsqrt.pop %v1575
    %v1578 = vrsqrt.pop %v1576
    %v1579 = vmul.f32 %v1573, %v1577
    %v1580 = vmul.f32 %v1574, %v1578
    %v1582 = vlaneseq
    %v1583 = vshrl.u32 %v1582, 7
    %v1584 = vsub.s32 0, %v1583
    %v1585 = vrot.slane %v893, %v1584
    %v1586 = vlaneseq
    %v1587 = vshrl.u32 %v1586, 7
    %v1588 = vsub.s32 1, %v1587
    %v1589 = vrot.slane %v893, %v1588
    %v1592 = vmul.f32 %v1579, %v1585
    %v1593 = vmul.f32 %v1580, %v1589
    %v1595 = vlaneseq
    %v1596 = vshrl.u32 %v1595, 7
    %v1597 = vsub.s32 0, %v1596
    %v1598 = vrot.slane %v895, %v1597
    %v1599 = vlaneseq
    %v1600 = vshrl.u32 %v1599, 7
    %v1601 = vsub.s32 1, %v1600
    %v1602 = vrot.slane %v895, %v1601
    %v1605 = vadd.f32 %v1592, %v1598
    %v1606 = vadd.f32 %v1593, %v1602
    %v1608 = vlaneseq
    %v1609 = vshrl.u32 %v1608, 7
    %v1610 = vsub.s32 0, %v1609
    %v1611 = vrot.slane %v879, %v1610
    %v1612 = vlaneseq
    %v1613 = vshrl.u32 %v1612, 7
    %v1614 = vsub.s32 1, %v1613
    %v1615 = vrot.slane %v879, %v1614
    %1618 = vmatprep.subr.mxu0 %v553
    %1619 = vmatpush1.msra.mxu0 %v552
    %1620 = vmatprep.subr.mxu0 %v555
    %1621 = vmatpush1.msra.mxu0 %v554
    %1622 = vmatprep.subr.mxu0 %v557
    %1623 = vmatpush1.msra.mxu0 %v556
    %1624 = vmatprep.subr.mxu0 %v559
    %1625 = vmatpush1.msra.mxu0 %v558
    %1626 = vmatprep.subr.mxu0 %v561
    %1627 = vmatpush1.msra.mxu0 %v560
    %1628 = vmatprep.subr.mxu0 %v563
    %1629 = vmatpush1.msra.mxu0 %v562
    %1630 = vmatprep.subr.mxu0 %v565
    %1631 = vmatpush1.msra.mxu0 %v564
    %1632 = vmatprep.subr.mxu0 %v567
    %1633 = vmatpush1.msra.mxu0 %v566
    %1634 = vmatprep.subr.mxu0 %v569
    %1635 = vmatpush1.msra.mxu0 %v568
    %1636 = vmatprep.subr.mxu0 %v571
    %1637 = vmatpush1.msra.mxu0 %v570
    %1638 = vmatprep.subr.mxu0 %v573
    %1639 = vmatpush1.msra.mxu0 %v572
    %1640 = vmatprep.subr.mxu0 %v575
    %1641 = vmatpush1.msra.mxu0 %v574
    %1642 = vmatprep.subr.mxu0 %v577
    %1643 = vmatpush1.msra.mxu0 %v576
    %1644 = vmatprep.subr.mxu0 %v579
    %1645 = vmatpush1.msra.mxu0 %v578
    %1646 = vmatprep.subr.mxu0 %v581
    %1647 = vmatpush1.msra.mxu0 %v580
    %1648 = vmatprep.subr.mxu0 %v583
    %1649 = vmatpush1.msra.mxu0 %v582
    %1650 = vmatprep.subr.mxu0 %v585
    %1651 = vmatpush1.msra.mxu0 %v584
    %1652 = vmatprep.subr.mxu0 %v587
    %1653 = vmatpush1.msra.mxu0 %v586
    %1654 = vmatprep.subr.mxu0 %v589
    %1655 = vmatpush1.msra.mxu0 %v588
    %1656 = vmatprep.subr.mxu0 %v591
    %1657 = vmatpush1.msra.mxu0 %v590
    %1658 = vmatprep.subr.mxu0 %v593
    %1659 = vmatpush1.msra.mxu0 %v592
    %1660 = vmatprep.subr.mxu0 %v595
    %1661 = vmatpush1.msra.mxu0 %v594
    %1662 = vmatprep.subr.mxu0 %v597
    %1663 = vmatpush1.msra.mxu0 %v596
    %1664 = vmatprep.subr.mxu0 %v599
    %1665 = vmatpush1.msra.mxu0 %v598
    %1666 = vmatprep.subr.mxu0 %v601
    %1667 = vmatpush1.msra.mxu0 %v600
    %1668 = vmatprep.subr.mxu0 %v603
    %1669 = vmatpush1.msra.mxu0 %v602
    %1670 = vmatprep.subr.mxu0 %v605
    %1671 = vmatpush1.msra.mxu0 %v604
    %1672 = vmatprep.subr.mxu0 %v607
    %1673 = vmatpush1.msra.mxu0 %v606
    %1674 = vmatprep.subr.mxu0 %v609
    %1675 = vmatpush1.msra.mxu0 %v608
    %1676 = vmatprep.subr.mxu0 %v611
    %1677 = vmatpush1.msra.mxu0 %v610
    %1678 = vmatprep.subr.mxu0 %v613
    %1679 = vmatpush1.msra.mxu0 %v612
    %1680 = vmatprep.subr.mxu0 %v615
    %1681 = vmatpush1.msra.mxu0 %v614
    %1682 = vmatprep.mubr.f32.mxu0 %v1606
    %1683 = vmatmul.mubr.f32.gmra.mrb[0].mxu0 %v1605
    %v1684 = vpop.f32.mrb[0].mxu0
    %v1685 = vadd.f32 %v1611, %v1684
    %v1686 = vpop.f32.mrb[0].mxu0
    %v1687 = vadd.f32 %v1615, %v1686
    %1688 = vdwg.mxu0
    %v1689 = vmax.f32 %v1685, 0.0
    %v1690 = vmax.f32 %v1687, 0.0
    %v1691 = vrot.slane %v1689, 4
    %v1692 = vadd.f32 %v1689, %v1691
    %v1693 = vrot.slane %v1692, 2
    %v1694 = vadd.f32 %v1692, %v1693
    %v1695 = vrot.slane %v1694, 1
    %v1696 = vadd.f32 %v1694, %v1695
    %v1697 = vrot.slane %v1690, 4
    %v1698 = vadd.f32 %v1690, %v1697
    %v1699 = vrot.slane %v1698, 2
    %v1700 = vadd.f32 %v1698, %v1699
    %v1701 = vrot.slane %v1700, 1
    %v1702 = vadd.f32 %v1700, %v1701
    %v1703 = vmul.f32 %v1696, %v1138
    %v1704 = vmul.f32 %v1702, %v1138
    %v1705 = vmul.f32 %v1689, %v1689
    %v1706 = vmul.f32 %v1690, %v1690
    %v1707 = vrot.slane %v1705, 4
    %v1708 = vadd.f32 %v1705, %v1707
    %v1709 = vrot.slane %v1708, 2
    %v1710 = vadd.f32 %v1708, %v1709
    %v1711 = vrot.slane %v1710, 1
    %v1712 = vadd.f32 %v1710, %v1711
    %v1713 = vrot.slane %v1706, 4
    %v1714 = vadd.f32 %v1706, %v1713
    %v1715 = vrot.slane %v1714, 2
    %v1716 = vadd.f32 %v1714, %v1715
    %v1717 = vrot.slane %v1716, 1
    %v1718 = vadd.f32 %v1716, %v1717
    %v1719 = vmul.f32 %v1712, %v1138
    %v1720 = vmul.f32 %v1718, %v1138
    %v1721 = vmul.f32 %v1703, %v1703
    %v1722 = vmul.f32 %v1704, %v1704
    %v1723 = vsub.f32 %v1719, %v1721
    %v1724 = vsub.f32 %v1720, %v1722
    %v1725 = vsub.f32 %v1689, %v1703
    %v1726 = vsub.f32 %v1690, %v1704
    %v1727 = vadd.f32 %v1723, 1e-05
    %v1728 = vadd.f32 %v1724, 1e-05
    %v1729 = vrsqrt.pop %v1727
    %v1730 = vrsqrt.pop %v1728
    %v1731 = vmul.f32 %v1725, %v1729
    %v1732 = vmul.f32 %v1726, %v1730
    %v1734 = vlaneseq
    %v1735 = vshrl.u32 %v1734, 7
    %v1736 = vsub.s32 0, %v1735
    %v1737 = vrot.slane %v897, %v1736
    %v1738 = vlaneseq
    %v1739 = vshrl.u32 %v1738, 7
    %v1740 = vsub.s32 1, %v1739
    %v1741 = vrot.slane %v897, %v1740
    %v1744 = vmul.f32 %v1731, %v1737
    %v1745 = vmul.f32 %v1732, %v1741
    %v1747 = vlaneseq
    %v1748 = vshrl.u32 %v1747, 7
    %v1749 = vsub.s32 0, %v1748
    %v1750 = vrot.slane %v899, %v1749
    %v1751 = vlaneseq
    %v1752 = vshrl.u32 %v1751, 7
    %v1753 = vsub.s32 1, %v1752
    %v1754 = vrot.slane %v899, %v1753
    %v1757 = vadd.f32 %v1744, %v1750
    %v1758 = vadd.f32 %v1745, %v1754
    %v1760 = vlaneseq
    %v1761 = vshrl.u32 %v1760, 7
    %v1762 = vsub.s32 0, %v1761
    %v1763 = vrot.slane %v883, %v1762
    %v1764 = vlaneseq
    %v1765 = vshrl.u32 %v1764, 7
    %v1766 = vsub.s32 1, %v1765
    %v1767 = vrot.slane %v883, %v1766
    %v1768 = vlaneseq
    %v1769 = vshrl.u32 %v1768, 7
    %v1770 = vsub.s32 2, %v1769
    %v1771 = vrot.slane %v883, %v1770
    %v1772 = vlaneseq
    %v1773 = vshrl.u32 %v1772, 7
    %v1774 = vsub.s32 3, %v1773
    %v1775 = vrot.slane %v883, %v1774
    %v1776 = vlaneseq
    %v1777 = vshrl.u32 %v1776, 7
    %v1778 = vsub.s32 4, %v1777
    %v1779 = vrot.slane %v883, %v1778
    %1785 = vmatprep.subr.mxu0 %v713
    %1786 = vmatpush1.msra.mxu0 %v712
    %1787 = vmatprep.subr.mxu0 %v718
    %1788 = vmatpush1.msra.mxu0 %v717
    %1789 = vmatprep.subr.mxu0 %v723
    %1790 = vmatpush1.msra.mxu0 %v722
    %1791 = vmatprep.subr.mxu0 %v728
    %1792 = vmatpush1.msra.mxu0 %v727
    %1793 = vmatprep.subr.mxu0 %v733
    %1794 = vmatpush1.msra.mxu0 %v732
    %1795 = vmatprep.subr.mxu0 %v738
    %1796 = vmatpush1.msra.mxu0 %v737
    %1797 = vmatprep.subr.mxu0 %v743
    %1798 = vmatpush1.msra.mxu0 %v742
    %1799 = vmatprep.subr.mxu0 %v748
    %1800 = vmatpush1.msra.mxu0 %v747
    %1801 = vmatprep.subr.mxu0 %v753
    %1802 = vmatpush1.msra.mxu0 %v752
    %1803 = vmatprep.subr.mxu0 %v758
    %1804 = vmatpush1.msra.mxu0 %v757
    %1805 = vmatprep.subr.mxu0 %v763
    %1806 = vmatpush1.msra.mxu0 %v762
    %1807 = vmatprep.subr.mxu0 %v768
    %1808 = vmatpush1.msra.mxu0 %v767
    %1809 = vmatprep.subr.mxu0 %v773
    %1810 = vmatpush1.msra.mxu0 %v772
    %1811 = vmatprep.subr.mxu0 %v778
    %1812 = vmatpush1.msra.mxu0 %v777
    %1813 = vmatprep.subr.mxu0 %v783
    %1814 = vmatpush1.msra.mxu0 %v782
    %1815 = vmatprep.subr.mxu0 %v788
    %1816 = vmatpush1.msra.mxu0 %v787
    %1817 = vmatprep.subr.mxu0 %v793
    %1818 = vmatpush1.msra.mxu0 %v792
    %1819 = vmatprep.subr.mxu0 %v798
    %1820 = vmatpush1.msra.mxu0 %v797
    %1821 = vmatprep.subr.mxu0 %v803
    %1822 = vmatpush1.msra.mxu0 %v802
    %1823 = vmatprep.subr.mxu0 %v808
    %1824 = vmatpush1.msra.mxu0 %v807
    %1825 = vmatprep.subr.mxu0 %v813
    %1826 = vmatpush1.msra.mxu0 %v812
    %1827 = vmatprep.subr.mxu0 %v818
    %1828 = vmatpush1.msra.mxu0 %v817
    %1829 = vmatprep.subr.mxu0 %v823
    %1830 = vmatpush1.msra.mxu0 %v822
    %1831 = vmatprep.subr.mxu0 %v828
    %1832 = vmatpush1.msra.mxu0 %v827
    %1833 = vmatprep.subr.mxu0 %v833
    %1834 = vmatpush1.msra.mxu0 %v832
    %1835 = vmatprep.subr.mxu0 %v838
    %1836 = vmatpush1.msra.mxu0 %v837
    %1837 = vmatprep.subr.mxu0 %v843
    %1838 = vmatpush1.msra.mxu0 %v842
    %1839 = vmatprep.subr.mxu0 %v848
    %1840 = vmatpush1.msra.mxu0 %v847
    %1841 = vmatprep.subr.mxu0 %v853
    %1842 = vmatpush1.msra.mxu0 %v852
    %1843 = vmatprep.subr.mxu0 %v858
    %1844 = vmatpush1.msra.mxu0 %v857
    %1845 = vmatprep.subr.mxu0 %v863
    %1846 = vmatpush1.msra.mxu0 %v862
    %1847 = vmatprep.subr.mxu0 %v868
    %1848 = vmatpush1.msra.mxu0 %v867
    %1849 = vmatprep.mubr.f32.mxu0 %v1758
    %1850 = vmatmul.mubr.f32.gmra.mrb[0].mxu0 %v1757
    %v1851 = vpop.f32.mrb[0].mxu0
    %v1852 = vadd.f32 %v1763, %v1851
    %v1853 = vpop.f32.mrb[0].mxu0
    %v1854 = vadd.f32 %v1767, %v1853
    %1855 = vdwg.mxu0
    %1856 = vmatprep.subr.mxu0 %v715
    %1857 = vmatpush1.msra.mxu0 %v714
    %1858 = vmatprep.subr.mxu0 %v720
    %1859 = vmatpush1.msra.mxu0 %v719
    %1860 = vmatprep.subr.mxu0 %v725
    %1861 = vmatpush1.msra.mxu0 %v724
    %1862 = vmatprep.subr.mxu0 %v730
    %1863 = vmatpush1.msra.mxu0 %v729
    %1864 = vmatprep.subr.mxu0 %v735
    %1865 = vmatpush1.msra.mxu0 %v734
    %1866 = vmatprep.subr.mxu0 %v740
    %1867 = vmatpush1.msra.mxu0 %v739
    %1868 = vmatprep.subr.mxu0 %v745
    %1869 = vmatpush1.msra.mxu0 %v744
    %1870 = vmatprep.subr.mxu0 %v750
    %1871 = vmatpush1.msra.mxu0 %v749
    %1872 = vmatprep.subr.mxu0 %v755
    %1873 = vmatpush1.msra.mxu0 %v754
    %1874 = vmatprep.subr.mxu0 %v760
    %1875 = vmatpush1.msra.mxu0 %v759
    %1876 = vmatprep.subr.mxu0 %v765
    %1877 = vmatpush1.msra.mxu0 %v764
    %1878 = vmatprep.subr.mxu0 %v770
    %1879 = vmatpush1.msra.mxu0 %v769
    %1880 = vmatprep.subr.mxu0 %v775
    %1881 = vmatpush1.msra.mxu0 %v774
    %1882 = vmatprep.subr.mxu0 %v780
    %1883 = vmatpush1.msra.mxu0 %v779
    %1884 = vmatprep.subr.mxu0 %v785
    %1885 = vmatpush1.msra.mxu0 %v784
    %1886 = vmatprep.subr.mxu0 %v790
    %1887 = vmatpush1.msra.mxu0 %v789
    %1888 = vmatprep.subr.mxu0 %v795
    %1889 = vmatpush1.msra.mxu0 %v794
    %1890 = vmatprep.subr.mxu0 %v800
    %1891 = vmatpush1.msra.mxu0 %v799
    %1892 = vmatprep.subr.mxu0 %v805
    %1893 = vmatpush1.msra.mxu0 %v804
    %1894 = vmatprep.subr.mxu0 %v810
    %1895 = vmatpush1.msra.mxu0 %v809
    %1896 = vmatprep.subr.mxu0 %v815
    %1897 = vmatpush1.msra.mxu0 %v814
    %1898 = vmatprep.subr.mxu0 %v820
    %1899 = vmatpush1.msra.mxu0 %v819
    %1900 = vmatprep.subr.mxu0 %v825
    %1901 = vmatpush1.msra.mxu0 %v824
    %1902 = vmatprep.subr.mxu0 %v830
    %1903 = vmatpush1.msra.mxu0 %v829
    %1904 = vmatprep.subr.mxu0 %v835
    %1905 = vmatpush1.msra.mxu0 %v834
    %1906 = vmatprep.subr.mxu0 %v840
    %1907 = vmatpush1.msra.mxu0 %v839
    %1908 = vmatprep.subr.mxu0 %v845
    %1909 = vmatpush1.msra.mxu0 %v844
    %1910 = vmatprep.subr.mxu0 %v850
    %1911 = vmatpush1.msra.mxu0 %v849
    %1912 = vmatprep.subr.mxu0 %v855
    %1913 = vmatpush1.msra.mxu0 %v854
    %1914 = vmatprep.subr.mxu0 %v860
    %1915 = vmatpush1.msra.mxu0 %v859
    %1916 = vmatprep.subr.mxu0 %v865
    %1917 = vmatpush1.msra.mxu0 %v864
    %1918 = vmatprep.subr.mxu0 %v870
    %1919 = vmatpush1.msra.mxu0 %v869
    %1920 = vmatprep.mubr.f32.mxu0 %v1758
    %1921 = vmatmul.mubr.f32.gmra.mrb[0].mxu0 %v1757
    %v1922 = vpop.f32.mrb[0].mxu0
    %v1923 = vadd.f32 %v1771, %v1922
    %v1924 = vpop.f32.mrb[0].mxu0
    %v1925 = vadd.f32 %v1775, %v1924
    %1926 = vdwg.mxu0
    %1927 = vmatprep.subr.mxu0 0.0
    %1928 = vmatpush1.msra.mxu0 %v716
    %1929 = vmatprep.subr.mxu0 0.0
    %1930 = vmatpush1.msra.mxu0 %v721
    %1931 = vmatprep.subr.mxu0 0.0
    %1932 = vmatpush1.msra.mxu0 %v726
    %1933 = vmatprep.subr.mxu0 0.0
    %1934 = vmatpush1.msra.mxu0 %v731
    %1935 = vmatprep.subr.mxu0 0.0
    %1936 = vmatpush1.msra.mxu0 %v736
    %1937 = vmatprep.subr.mxu0 0.0
    %1938 = vmatpush1.msra.mxu0 %v741
    %1939 = vmatprep.subr.mxu0 0.0
    %1940 = vmatpush1.msra.mxu0 %v746
    %1941 = vmatprep.subr.mxu0 0.0
    %1942 = vmatpush1.msra.mxu0 %v751
    %1943 = vmatprep.subr.mxu0 0.0
    %1944 = vmatpush1.msra.mxu0 %v756
    %1945 = vmatprep.subr.mxu0 0.0
    %1946 = vmatpush1.msra.mxu0 %v761
    %1947 = vmatprep.subr.mxu0 0.0
    %1948 = vmatpush1.msra.mxu0 %v766
    %1949 = vmatprep.subr.mxu0 0.0
    %1950 = vmatpush1.msra.mxu0 %v771
    %1951 = vmatprep.subr.mxu0 0.0
    %1952 = vmatpush1.msra.mxu0 %v776
    %1953 = vmatprep.subr.mxu0 0.0
    %1954 = vmatpush1.msra.mxu0 %v781
    %1955 = vmatprep.subr.mxu0 0.0
    %1956 = vmatpush1.msra.mxu0 %v786
    %1957 = vmatprep.subr.mxu0 0.0
    %1958 = vmatpush1.msra.mxu0 %v791
    %1959 = vmatprep.subr.mxu0 0.0
    %1960 = vmatpush1.msra.mxu0 %v796
    %1961 = vmatprep.subr.mxu0 0.0
    %1962 = vmatpush1.msra.mxu0 %v801
    %1963 = vmatprep.subr.mxu0 0.0
    %1964 = vmatpush1.msra.mxu0 %v806
    %1965 = vmatprep.subr.mxu0 0.0
    %1966 = vmatpush1.msra.mxu0 %v811
    %1967 = vmatprep.subr.mxu0 0.0
    %1968 = vmatpush1.msra.mxu0 %v816
    %1969 = vmatprep.subr.mxu0 0.0
    %1970 = vmatpush1.msra.mxu0 %v821
    %1971 = vmatprep.subr.mxu0 0.0
    %1972 = vmatpush1.msra.mxu0 %v826
    %1973 = vmatprep.subr.mxu0 0.0
    %1974 = vmatpush1.msra.mxu0 %v831
    %1975 = vmatprep.subr.mxu0 0.0
    %1976 = vmatpush1.msra.mxu0 %v836
    %1977 = vmatprep.subr.mxu0 0.0
    %1978 = vmatpush1.msra.mxu0 %v841
    %1979 = vmatprep.subr.mxu0 0.0
    %1980 = vmatpush1.msra.mxu0 %v846
    %1981 = vmatprep.subr.mxu0 0.0
    %1982 = vmatpush1.msra.mxu0 %v851
    %1983 = vmatprep.subr.mxu0 0.0
    %1984 = vmatpush1.msra.mxu0 %v856
    %1985 = vmatprep.subr.mxu0 0.0
    %1986 = vmatpush1.msra.mxu0 %v861
    %1987 = vmatprep.subr.mxu0 0.0
    %1988 = vmatpush1.msra.mxu0 %v866
    %1989 = vmatprep.subr.mxu0 0.0
    %1990 = vmatpush1.msra.mxu0 %v871
    %1991 = vmatprep.mubr.f32.mxu0 %v1758
    %1992 = vmatmul.mubr.f32.gmra.mrb[0].mxu0 %v1757
    %v1993 = vpop.f32.mrb[0].mxu0
    %v1994 = vadd.f32 %v1779, %v1993
    %v1995 = vpop.f32.mrb[0].mxu0
    %1996 = vdwg.mxu0
    %v1997 = vxor.u32 %v1852, 2147483648
    %v1998 = vxor.u32 %v1854, 2147483648
    %v1999 = vxor.u32 %v1923, 2147483648
    %v2000 = vxor.u32 %v1925, 2147483648
    %v2001 = vxor.u32 %v1994, 2147483648
    %v2002 = vmul.f32 %v1997, 1.442695
    %v2003 = vpow.pop %v2002
    %v2004 = vmul.f32 %v1998, 1.442695
    %v2005 = vpow.pop %v2004
    %v2006 = vmul.f32 %v1999, 1.442695
    %v2007 = vpow.pop %v2006
    %v2008 = vmul.f32 %v2000, 1.442695
    %v2009 = vpow.pop %v2008
    %v2010 = vmul.f32 %v2001, 1.442695
    %v2011 = vpow.pop %v2010
    %v2012 = vadd.f32 %v2003, 1.0
    %v2013 = vadd.f32 %v2005, 1.0
    %v2014 = vadd.f32 %v2007, 1.0
    %v2015 = vadd.f32 %v2009, 1.0
    %v2016 = vadd.f32 %v2011, 1.0
    %v2017 = vrcp.pop %v2012
    %v2018 = vmul.f32 1.0, %v2017
    %v2019 = vrcp.pop %v2013
    %v2020 = vmul.f32 1.0, %v2019
    %v2021 = vrcp.pop %v2014
    %v2022 = vmul.f32 1.0, %v2021
    %v2023 = vrcp.pop %v2015
    %v2024 = vmul.f32 1.0, %v2023
    %v2025 = vrcp.pop %v2016
    %v2026 = vmul.f32 1.0, %v2025
    %2027 = vst [vmem:[#allocation14] sm:$0xff] %v2018
    %2028 = vst [vmem:[#allocation14 + $0x8] sm:$0xff] %v2020
    %2029 = vst [vmem:[#allocation14 + $0x10] sm:$0xff] %v2022
    %2030 = vst [vmem:[#allocation14 + $0x18] sm:$0xff] %v2024
    %2031 = vst [vmem:[#allocation14 + $0x20] sm:$0xff] %v2026
    %v2032 = vsub.f32 %v2018, %v90
    %v2033 = vsub.f32 %v2020, %v91
    %v2034 = vsub.f32 %v2022, %v92
    %v2035 = vsub.f32 %v2024, %v93
    %v2036 = vsub.f32 %v2026, %v94
    %v2037 = vmul.f32 %v2032, %v2032
    %v2038 = vmul.f32 %v2033, %v2033
    %v2039 = vmul.f32 %v2034, %v2034
    %v2040 = vmul.f32 %v2035, %v2035
    %v2041 = vmul.f32 %v2036, %v2036
    %v2042 = vadd.f32 %v2037, %v2038
    %v2043 = vadd.f32 %v2042, %v2039
    %v2044 = vadd.f32 %v2043, %v2040
    %v2045 = vadd.f32 %v2044, %v2041
    %2046 = vadd.xlane.f32.xlu0 %v2045
    %v2047 = vpop.xlane.xlu0 %2046
    %v2048 = vrot.slane %v2047, 4
    %v2049 = vadd.f32 %v2047, %v2048
    %v2050 = vrot.slane %v2049, 2
    %v2051 = vadd.f32 %v2049, %v2050
    %v2052 = vrot.slane %v2051, 1
    %v2053 = vadd.f32 %v2051, %v2052
    %s2054 = vtos %v2053
    %s2055 = smul.f32 %s2054, 0.0001953125
    %s2056 = sadd.f32 %s1444, %s2055
    %s2057 = ssub.f32 0.0, %s2056
    %s2058 = scalar_lea.smem [#allocation12], 0
    %2059 = sst [smem:[%s2058]] %s2057
    // Predicated region
    $region42: #{vae_forward.1} parent=1 // pred_check
      _
    $region43: #{vae_forward.1} parent=1 // pred_check_branch
      %2061 = sbr.rel (0) target = $region45
    $region44: #{vae_forward.1} parent=1 // pred_region
      %s2063 = ssub.s32 16, 16
      %2064 = vsyncadd [#allocation5], %s2063
      %2067 = dma.smem_to_hbm [#allocation12], 16, %s5, [#allocation5]
    $region45: #{vae_forward.1} parent=1 // pred_fallthru
      _
    // Predicated region
    $region46: #{vae_forward.1} parent=1 // pred_check
      _
    $region47: #{vae_forward.1} parent=1 // pred_check_branch
      %2069 = sbr.rel (0) target = $region49
    $region48: #{vae_forward.1} parent=1 // pred_region
      %s2071 = ssub.s32 128, 128
      %2072 = vsyncadd [#allocation4], %s2071
      %s2074 = sshll.u32 [#allocation13], 4
      %s2075 = int_to_ptr.vmem [resolvable:$true] %s2074
      %2077 = dma.vmem_to_hbm [thread:$0]  %s2075, 128, %s6, [#allocation4]
    $region49: #{vae_forward.1} parent=1 // pred_fallthru
      _
    // Predicated region
    $region50: #{vae_forward.1} parent=1 // pred_check
      _
    $region51: #{vae_forward.1} parent=1 // pred_check_branch
      %2079 = sbr.rel (0) target = $region53
    $region52: #{vae_forward.1} parent=1 // pred_region
      %s2081 = ssub.s32 640, 640
      %2082 = vsyncadd [#allocation15], %s2081
      %s2084 = sshll.u32 [#allocation14], 4
      %s2085 = int_to_ptr.vmem [resolvable:$true] %s2084
      %2087 = dma.vmem_to_hbm [thread:$0]  %s2085, 640, %s7, [#allocation15]
    $region53: #{vae_forward.1} parent=1 // pred_fallthru
      _
    // Predicated region
    $region54: #{vae_forward.1} parent=1 // pred_check
      _
    $region55: #{vae_forward.1} parent=1 // pred_check_branch
      %2089 = sbr.rel (0) target = $region57
    $region56: #{vae_forward.1} parent=1 // pred_region
      %2090 = dma.done [#allocation5], 16
    $region57: #{vae_forward.1} parent=1 // pred_fallthru
      _
    // Predicated region
    $region58: #{vae_forward.1} parent=1 // pred_check
      _
    $region59: #{vae_forward.1} parent=1 // pred_check_branch
      %2092 = sbr.rel (0) target = $region61
    $region60: #{vae_forward.1} parent=1 // pred_region
      %2093 = dma.done [#allocation4], 128
    $region61: #{vae_forward.1} parent=1 // pred_fallthru
      _
    // Predicated region
    $region62: #{vae_forward.1} parent=1 // pred_check
      _
    $region63: #{vae_forward.1} parent=1 // pred_check_branch
      %2095 = sbr.rel (0) target = $region65
    $region64: #{vae_forward.1} parent=1 // pred_region
      %2096 = dma.done [#allocation15], 640
    $region65: #{vae_forward.1} parent=1 // pred_fallthru
      _
    %2097 = sfence
    %2098 = vsyncpa [#allocation3], 1
    %2099 = vsyncpa [#allocation7], 1
    %2100 = vsyncpa [#allocation10], 1
    %2101 = vsyncpa [#allocation4], 1
    %2102 = vsyncpa [#allocation15], 1
    %2103 = vsyncpa [#allocation5], 1

</llo_original>
